<compile_context>
chip_gen: v6e
topology: v6e:2x2x1
jax: 0.10.0
libtpu: 0.0.40
codegen_flags: <defaults>
</compile_context>

<pallas_src>
import math

import jax
import jax.numpy as jnp
from jax.experimental import pallas as pl
from jax.experimental.pallas import tpu as pltpu


def _lstm_recurrence_kernel(len_ref, xg_ref, whh_ref,
                            out_ref, ht_ref, ct_ref, h_sc, c_sc):
    """One grid step processes a block of TS time steps.

    len_ref: (B, 1)       int32 sequence lengths (block-invariant)
    xg_ref : (B, TS, 4H)  precomputed x @ W_ih^T + b_ih + b_hh for this block
    whh_ref: (H, 4H)      hidden->gates weights (transposed, gate order i,f,g,o)
    out_ref: (B, TS, H)   per-block outputs (zeroed past each sequence's length)
    ht_ref : (B, H)       resident accumulator: final hidden state
    ct_ref : (B, H)       resident accumulator: final cell state
    h_sc/c_sc: (B, H) f32 VMEM scratch carrying the recurrence across blocks
    """
    tb = pl.program_id(0)
    ts = xg_ref.shape[1]
    H = ht_ref.shape[1]

    @pl.when(tb == 0)
    def _():
        h_sc[...] = jnp.zeros_like(h_sc)
        c_sc[...] = jnp.zeros_like(c_sc)

    lens = len_ref[...]            # (B, 1) int32
    whh = whh_ref[...]             # (H, 4H)

    h = h_sc[...]                  # (B, H) f32
    c = c_sc[...]

    # Statically unrolled inner loop over the TS steps of this block.  Only
    # the small recurrent matmul h @ W_hh and the gate nonlinearities sit on
    # the serial critical path; the x-projection was hoisted into one big
    # batched matmul in the wrapper.
    for s in range(ts):
        t = tb * ts + s
        gates = xg_ref[:, s, :] + jnp.dot(
            h, whh, preferred_element_type=jnp.float32)          # (B, 4H)

        i = jax.nn.sigmoid(gates[:, 0 * H:1 * H])
        f = jax.nn.sigmoid(gates[:, 1 * H:2 * H])
        g = jnp.tanh(gates[:, 2 * H:3 * H])
        o = jax.nn.sigmoid(gates[:, 3 * H:4 * H])

        c_new = f * c + i * g
        h_new = o * jnp.tanh(c_new)

        valid = t < lens                                          # (B, 1) bool
        h = jnp.where(valid, h_new, h)
        c = jnp.where(valid, c_new, c)

        out_ref[:, s, :] = jnp.where(valid, h_new, 0.0).astype(out_ref.dtype)

    h_sc[...] = h
    c_sc[...] = c

    # Only materialise the resident final-state outputs on the last time block
    # (they are written back to HBM once, after the grid finishes).
    @pl.when(tb == pl.num_programs(0) - 1)
    def _():
        ht_ref[...] = h.astype(ht_ref.dtype)
        ct_ref[...] = c.astype(ct_ref.dtype)


def dynamic_lstm_pallas(x, x_len, w_ih, w_hh, b_ih, b_hh, *, time_block=8):
    """x: (B, T, D) float32 (batch_first), x_len: (B,) int.

    Returns out (B, T, H) (zero-padded past each x_len; caller may slice to
    max(x_len) to match pad_packed_sequence), ht (1, B, H), ct (1, B, H).
    """
    B, T, D = x.shape
    H = w_hh.shape[1]
    G = 4 * H

    # --- hoisted input projection (time-independent) as ONE big matmul ------
    xg = jnp.dot(x.astype(jnp.float32).reshape(B * T, D),
                 jnp.transpose(w_ih).astype(jnp.float32),
                 precision=jax.lax.Precision.HIGHEST,
                 preferred_element_type=jnp.float32)
    xg = xg.reshape(B, T, G) + (b_ih + b_hh).astype(jnp.float32)   # (B, T, 4H)

    # --- time blocking -------------------------------------------------------
    ts = max(8, int(time_block))
    ts -= ts % 8                       # keep the block a multiple of 8 sublanes
    nb = pl.cdiv(T, ts)
    T_pad = nb * ts
    if T_pad != T:
        # Padded steps are masked off (t >= x_len), so zeros are fine.
        xg = jnp.pad(xg, ((0, 0), (0, T_pad - T), (0, 0)))

    lens = x_len.astype(jnp.int32).reshape(B, 1)
    whh_t = jnp.transpose(w_hh).astype(jnp.float32)                # (H, 4H)

    out_p, ht, ct = pl.pallas_call(
        _lstm_recurrence_kernel,
        out_shape=(
            jax.ShapeDtypeStruct((B, T_pad, H), jnp.float32),
            jax.ShapeDtypeStruct((B, H), jnp.float32),
            jax.ShapeDtypeStruct((B, H), jnp.float32),
        ),
        grid_spec=pltpu.PrefetchScalarGridSpec(
            num_scalar_prefetch=0,
            grid=(nb,),
            in_specs=[
                pl.BlockSpec((B, 1), lambda tb: (0, 0)),
                pl.BlockSpec((B, ts, G), lambda tb: (0, tb, 0)),
                pl.BlockSpec((H, G), lambda tb: (0, 0)),
            ],
            out_specs=[
                pl.BlockSpec((B, ts, H), lambda tb: (0, tb, 0)),
                pl.BlockSpec((B, H), lambda tb: (0, 0)),
                pl.BlockSpec((B, H), lambda tb: (0, 0)),
            ],
            scratch_shapes=[
                pltpu.VMEM((B, H), jnp.float32),
                pltpu.VMEM((B, H), jnp.float32),
            ],
        ),
        compiler_params=pltpu.CompilerParams(
            dimension_semantics=("arbitrary",)),   # time axis is a recurrence
    )(lens, xg, whh_t)

    out = out_p[:, :T]
    return out, ht[None], ct[None]


def dynamic_lstm_ref(x, x_len, w_ih, w_hh, b_ih, b_hh):
    """Pure-JAX reference (lax.scan), identical masked-LSTM semantics."""
    B, T, D = x.shape
    H = w_hh.shape[1]
    hi = jax.lax.Precision.HIGHEST

    def step(carry, inp):
        h, c = carry
        xt, t = inp
        gates = (jnp.dot(xt, w_ih.T, precision=hi)
                 + jnp.dot(h, w_hh.T, precision=hi) + b_ih + b_hh)
        i, f, g, o = jnp.split(gates, 4, axis=-1)
        i, f, o = jax.nn.sigmoid(i), jax.nn.sigmoid(f), jax.nn.sigmoid(o)
        g = jnp.tanh(g)
        c_new = f * c + i * g
        h_new = o * jnp.tanh(c_new)
        valid = (t < x_len)[:, None]
        h2 = jnp.where(valid, h_new, h)
        c2 = jnp.where(valid, c_new, c)
        out = jnp.where(valid, h_new, 0.0)
        return (h2, c2), out

    init = (jnp.zeros((B, H), jnp.float32), jnp.zeros((B, H), jnp.float32))
    (hT, cT), outs = jax.lax.scan(
        step, init, (jnp.transpose(x, (1, 0, 2)), jnp.arange(T)))
    return jnp.transpose(outs, (1, 0, 2)), hT[None], cT[None]


# TODO(synk): GRU / vanilla-RNN cell types, bidirectional, num_layers>1 and
# inter-layer dropout paths of DynamicLSTM are not implemented; this covers the
# default LSTM / num_layers=1 / unidirectional forward.

if __name__ == "__main__":
    # Module config: DynamicLSTM(input_size=64, hidden_size=32, num_layers=1,
    #                            bias=True, batch_first=True, rnn_type='LSTM')
    B, T, D, H = 2, 8, 64, 32

    key = jax.random.PRNGKey(0)
    kx, k1, k2, k3, k4 = jax.random.split(key, 5)

    x = jax.random.normal(kx, (B, T, D), dtype=jnp.float32)
    x_len = jnp.array([T, 5], dtype=jnp.int32)   # max(x_len) == T

    # Deterministic PyTorch-style init: U(-1/sqrt(H), 1/sqrt(H)), gate order i,f,g,o.
    k = 1.0 / math.sqrt(H)
    w_ih = jax.random.uniform(k1, (4 * H, D), minval=-k, maxval=k, dtype=jnp.float32)
    w_hh = jax.random.uniform(k2, (4 * H, H), minval=-k, maxval=k, dtype=jnp.float32)
    b_ih = jax.random.uniform(k3, (4 * H,), minval=-k, maxval=k, dtype=jnp.float32)
    b_hh = jax.random.uniform(k4, (4 * H,), minval=-k, maxval=k, dtype=jnp.float32)

    out, ht, ct = dynamic_lstm_pallas(x, x_len, w_ih, w_hh, b_ih, b_hh)
    out = jax.block_until_ready(out)
    ht = jax.block_until_ready(ht)
    ct = jax.block_until_ready(ct)

    # pad_packed_sequence pads out to max(x_len) steps (== T here).
    max_len = int(jnp.max(x_len))
    out = out[:, :max_len]

    out_r, ht_r, ct_r = dynamic_lstm_ref(x, x_len, w_ih, w_hh, b_ih, b_hh)
    out_r = out_r[:, :max_len]

    assert jnp.allclose(out, out_r, atol=1e-4, rtol=1e-4)
    assert jnp.allclose(ht, ht_r, atol=1e-4, rtol=1e-4)
    assert jnp.allclose(ct, ct_r, atol=1e-4, rtol=1e-4)

    print("KERNEL_OK")
</pallas_src>

<mosaic_0001>
module attributes {stable_mosaic.version = 11 : i64} {
  func.func @_lstm_recurrence_kernel(%arg0: i32, %arg1: memref<2x1xi32, #tpu.memory_space<vmem>>, %arg2: memref<2x8x128xf32, #tpu.memory_space<vmem>>, %arg3: memref<32x128xf32, #tpu.memory_space<vmem>>, %arg4: memref<2x8x32xf32, #tpu.memory_space<vmem>>, %arg5: memref<2x32xf32, #tpu.memory_space<vmem>>, %arg6: memref<2x32xf32, #tpu.memory_space<vmem>>, %arg7: memref<2x32xf32, #tpu.memory_space<vmem>>, %arg8: memref<2x32xf32, #tpu.memory_space<vmem>>) attributes {dimension_semantics = [#tpu.dimension_semantics<arbitrary>], iteration_bounds = array<i64: 1>, scalar_prefetch = 0 : i64, scratch_operands = 2 : i64, tpu.core_type = #tpu.core_type<tc>, window_params = [{pipeline_mode = #tpu.pipeline_mode<synchronous>, transform_indices = @transform_0, window_bounds = array<i64: 2, 1>}, {transform_indices = @transform_1, window_bounds = array<i64: 2, 8, 128>}, {pipeline_mode = #tpu.pipeline_mode<synchronous>, transform_indices = @transform_2, window_bounds = array<i64: 32, 128>}, {transform_indices = @transform_3, window_bounds = array<i64: 2, 8, 32>}, {pipeline_mode = #tpu.pipeline_mode<synchronous>, transform_indices = @transform_4, window_bounds = array<i64: 2, 32>}, {pipeline_mode = #tpu.pipeline_mode<synchronous>, transform_indices = @transform_5, window_bounds = array<i64: 2, 32>}]} {
    %c0_i32 = arith.constant 0 : i32
    %0 = arith.cmpi eq, %arg0, %c0_i32 : i32
    %1 = arith.extui %0 : i1 to i32
    %c0_i32_0 = arith.constant 0 : i32
    %2 = arith.cmpi ne, %1, %c0_i32_0 : i32
    scf.if %2 {
      %cst_102 = arith.constant 0.000000e+00 : f32
      %380 = vector.broadcast %cst_102 : f32 to vector<2x32xf32>
      %c0_103 = arith.constant 0 : index
      %c0_104 = arith.constant 0 : index
      %381 = vector.load %arg7[%c0_103, %c0_104] : memref<2x32xf32, #tpu.memory_space<vmem>>, vector<2x32xf32>
      tpu.vector_store %arg7[%c0_103, %c0_104], %380 {strides = array<i32>} : memref<2x32xf32, #tpu.memory_space<vmem>>, vector<2x32xf32>,
      %cst_105 = arith.constant 0.000000e+00 : f32
      %382 = vector.broadcast %cst_105 : f32 to vector<2x32xf32>
      %c0_106 = arith.constant 0 : index
      %c0_107 = arith.constant 0 : index
      %383 = vector.load %arg8[%c0_106, %c0_107] : memref<2x32xf32, #tpu.memory_space<vmem>>, vector<2x32xf32>
      tpu.vector_store %arg8[%c0_106, %c0_107], %382 {strides = array<i32>} : memref<2x32xf32, #tpu.memory_space<vmem>>, vector<2x32xf32>,
    } else {
    }
    %c0 = arith.constant 0 : index
    %c0_1 = arith.constant 0 : index
    %3 = vector.load %arg1[%c0, %c0_1] : memref<2x1xi32, #tpu.memory_space<vmem>>, vector<2x1xi32>
    %c0_2 = arith.constant 0 : index
    %c0_3 = arith.constant 0 : index
    %4 = vector.load %arg3[%c0_2, %c0_3] : memref<32x128xf32, #tpu.memory_space<vmem>>, vector<32x128xf32>
    %c0_4 = arith.constant 0 : index
    %c0_5 = arith.constant 0 : index
    %5 = vector.load %arg7[%c0_4, %c0_5] : memref<2x32xf32, #tpu.memory_space<vmem>>, vector<2x32xf32>
    %c0_6 = arith.constant 0 : index
    %c0_7 = arith.constant 0 : index
    %6 = vector.load %arg8[%c0_6, %c0_7] : memref<2x32xf32, #tpu.memory_space<vmem>>, vector<2x32xf32>
    %c8_i32 = arith.constant 8 : i32
    %7 = arith.muli %arg0, %c8_i32 : i32
    %c0_i32_8 = arith.constant 0 : i32
    %8 = arith.addi %7, %c0_i32_8 : i32
    %c0_9 = arith.constant 0 : index
    %c0_10 = arith.constant 0 : index
    %c0_11 = arith.constant 0 : index
    %9 = vector.load %arg2[%c0_9, %c0_10, %c0_11] : memref<2x8x128xf32, #tpu.memory_space<vmem>>, vector<2x1x128xf32>
    %10 = vector.shape_cast %9 : vector<2x1x128xf32> to vector<2x128xf32>
    %cst = arith.constant dense<0.000000e+00> : vector<2x128xf32>
    %11 = tpu.matmul %5, %4, %cst {dimension_numbers = #tpu.dot_dimension_numbers<[1], [0], [0], [1], [0, 0, 1, 1], [], []>} : vector<2x32xf32>, vector<32x128xf32>, vector<2x128xf32> -> vector<2x128xf32>
    %12 = arith.addf %10, %11 : vector<2x128xf32>
    %13 = vector.extract_strided_slice %12 {offsets = [0, 0], sizes = [2, 32], strides = [1, 1]} : vector<2x128xf32> to vector<2x32xf32>
    %14 = arith.negf %13 : vector<2x32xf32>
    %15 = math.exp %14 : vector<2x32xf32>
    %cst_12 = arith.constant 1.000000e+00 : f32
    %16 = vector.broadcast %cst_12 : f32 to vector<2x32xf32>
    %17 = arith.addf %16, %15 : vector<2x32xf32>
    %18 = arith.divf %16, %17 : vector<2x32xf32>
    %19 = vector.extract_strided_slice %12 {offsets = [0, 32], sizes = [2, 32], strides = [1, 1]} : vector<2x128xf32> to vector<2x32xf32>
    %20 = arith.negf %19 : vector<2x32xf32>
    %21 = math.exp %20 : vector<2x32xf32>
    %cst_13 = arith.constant 1.000000e+00 : f32
    %22 = vector.broadcast %cst_13 : f32 to vector<2x32xf32>
    %23 = arith.addf %22, %21 : vector<2x32xf32>
    %24 = arith.divf %22, %23 : vector<2x32xf32>
    %25 = vector.extract_strided_slice %12 {offsets = [0, 64], sizes = [2, 32], strides = [1, 1]} : vector<2x128xf32> to vector<2x32xf32>
    %26 = math.tanh %25 : vector<2x32xf32>
    %27 = vector.extract_strided_slice %12 {offsets = [0, 96], sizes = [2, 32], strides = [1, 1]} : vector<2x128xf32> to vector<2x32xf32>
    %28 = arith.negf %27 : vector<2x32xf32>
    %29 = math.exp %28 : vector<2x32xf32>
    %cst_14 = arith.constant 1.000000e+00 : f32
    %30 = vector.broadcast %cst_14 : f32 to vector<2x32xf32>
    %31 = arith.addf %30, %29 : vector<2x32xf32>
    %32 = arith.divf %30, %31 : vector<2x32xf32>
    %33 = arith.mulf %24, %6 : vector<2x32xf32>
    %34 = arith.mulf %18, %26 : vector<2x32xf32>
    %35 = arith.addf %33, %34 : vector<2x32xf32>
    %36 = math.tanh %35 : vector<2x32xf32>
    %37 = arith.mulf %32, %36 : vector<2x32xf32>
    %38 = vector.broadcast %8 : i32 to vector<2x1xi32>
    %39 = arith.cmpi slt, %38, %3 : vector<2x1xi32>
    %40 = vector.shape_cast %39 : vector<2x1xi1> to vector<2x1xi1>
    %41 = vector.broadcast %40 : vector<2x1xi1> to vector<2x32xi1>
    %42 = arith.select %41, %37, %5 : vector<2x32xi1>, vector<2x32xf32>
    %43 = vector.shape_cast %39 : vector<2x1xi1> to vector<2x1xi1>
    %44 = vector.broadcast %43 : vector<2x1xi1> to vector<2x32xi1>
    %45 = arith.select %44, %35, %6 : vector<2x32xi1>, vector<2x32xf32>
    %cst_15 = arith.constant 0.000000e+00 : f32
    %46 = vector.shape_cast %39 : vector<2x1xi1> to vector<2x1xi1>
    %47 = vector.broadcast %46 : vector<2x1xi1> to vector<2x32xi1>
    %48 = vector.broadcast %cst_15 : f32 to vector<2x32xf32>
    %49 = arith.select %47, %37, %48 : vector<2x32xi1>, vector<2x32xf32>
    %c0_16 = arith.constant 0 : index
    %c0_17 = arith.constant 0 : index
    %c0_18 = arith.constant 0 : index
    %50 = vector.load %arg4[%c0_16, %c0_17, %c0_18] : memref<2x8x32xf32, #tpu.memory_space<vmem>>, vector<2x1x32xf32>
    %51 = vector.shape_cast %50 : vector<2x1x32xf32> to vector<2x32xf32>
    %52 = vector.shape_cast %49 : vector<2x32xf32> to vector<2x1x32xf32>
    tpu.vector_store %arg4[%c0_16, %c0_17, %c0_18], %52 {strides = array<i32>} : memref<2x8x32xf32, #tpu.memory_space<vmem>>, vector<2x1x32xf32>,
    %c8_i32_19 = arith.constant 8 : i32
    %53 = arith.muli %arg0, %c8_i32_19 : i32
    %c1_i32 = arith.constant 1 : i32
    %54 = arith.addi %53, %c1_i32 : i32
    %c0_20 = arith.constant 0 : index
    %c1 = arith.constant 1 : index
    %c0_21 = arith.constant 0 : index
    %55 = vector.load %arg2[%c0_20, %c1, %c0_21] : memref<2x8x128xf32, #tpu.memory_space<vmem>>, vector<2x1x128xf32>
    %56 = vector.shape_cast %55 : vector<2x1x128xf32> to vector<2x128xf32>
    %cst_22 = arith.constant dense<0.000000e+00> : vector<2x128xf32>
    %57 = tpu.matmul %42, %4, %cst_22 {dimension_numbers = #tpu.dot_dimension_numbers<[1], [0], [0], [1], [0, 0, 1, 1], [], []>} : vector<2x32xf32>, vector<32x128xf32>, vector<2x128xf32> -> vector<2x128xf32>
    %58 = arith.addf %56, %57 : vector<2x128xf32>
    %59 = vector.extract_strided_slice %58 {offsets = [0, 0], sizes = [2, 32], strides = [1, 1]} : vector<2x128xf32> to vector<2x32xf32>
    %60 = arith.negf %59 : vector<2x32xf32>
    %61 = math.exp %60 : vector<2x32xf32>
    %cst_23 = arith.constant 1.000000e+00 : f32
    %62 = vector.broadcast %cst_23 : f32 to vector<2x32xf32>
    %63 = arith.addf %62, %61 : vector<2x32xf32>
    %64 = arith.divf %62, %63 : vector<2x32xf32>
    %65 = vector.extract_strided_slice %58 {offsets = [0, 32], sizes = [2, 32], strides = [1, 1]} : vector<2x128xf32> to vector<2x32xf32>
    %66 = arith.negf %65 : vector<2x32xf32>
    %67 = math.exp %66 : vector<2x32xf32>
    %cst_24 = arith.constant 1.000000e+00 : f32
    %68 = vector.broadcast %cst_24 : f32 to vector<2x32xf32>
    %69 = arith.addf %68, %67 : vector<2x32xf32>
    %70 = arith.divf %68, %69 : vector<2x32xf32>
    %71 = vector.extract_strided_slice %58 {offsets = [0, 64], sizes = [2, 32], strides = [1, 1]} : vector<2x128xf32> to vector<2x32xf32>
    %72 = math.tanh %71 : vector<2x32xf32>
    %73 = vector.extract_strided_slice %58 {offsets = [0, 96], sizes = [2, 32], strides = [1, 1]} : vector<2x128xf32> to vector<2x32xf32>
    %74 = arith.negf %73 : vector<2x32xf32>
    %75 = math.exp %74 : vector<2x32xf32>
    %cst_25 = arith.constant 1.000000e+00 : f32
    %76 = vector.broadcast %cst_25 : f32 to vector<2x32xf32>
    %77 = arith.addf %76, %75 : vector<2x32xf32>
    %78 = arith.divf %76, %77 : vector<2x32xf32>
    %79 = arith.mulf %70, %45 : vector<2x32xf32>
    %80 = arith.mulf %64, %72 : vector<2x32xf32>
    %81 = arith.addf %79, %80 : vector<2x32xf32>
    %82 = math.tanh %81 : vector<2x32xf32>
    %83 = arith.mulf %78, %82 : vector<2x32xf32>
    %84 = vector.broadcast %54 : i32 to vector<2x1xi32>
    %85 = arith.cmpi slt, %84, %3 : vector<2x1xi32>
    %86 = vector.shape_cast %85 : vector<2x1xi1> to vector<2x1xi1>
    %87 = vector.broadcast %86 : vector<2x1xi1> to vector<2x32xi1>
    %88 = arith.select %87, %83, %42 : vector<2x32xi1>, vector<2x32xf32>
    %89 = vector.shape_cast %85 : vector<2x1xi1> to vector<2x1xi1>
    %90 = vector.broadcast %89 : vector<2x1xi1> to vector<2x32xi1>
    %91 = arith.select %90, %81, %45 : vector<2x32xi1>, vector<2x32xf32>
    %cst_26 = arith.constant 0.000000e+00 : f32
    %92 = vector.shape_cast %85 : vector<2x1xi1> to vector<2x1xi1>
    %93 = vector.broadcast %92 : vector<2x1xi1> to vector<2x32xi1>
    %94 = vector.broadcast %cst_26 : f32 to vector<2x32xf32>
    %95 = arith.select %93, %83, %94 : vector<2x32xi1>, vector<2x32xf32>
    %c0_27 = arith.constant 0 : index
    %c1_28 = arith.constant 1 : index
    %c0_29 = arith.constant 0 : index
    %96 = vector.load %arg4[%c0_27, %c1_28, %c0_29] : memref<2x8x32xf32, #tpu.memory_space<vmem>>, vector<2x1x32xf32>
    %97 = vector.shape_cast %96 : vector<2x1x32xf32> to vector<2x32xf32>
    %98 = vector.shape_cast %95 : vector<2x32xf32> to vector<2x1x32xf32>
    tpu.vector_store %arg4[%c0_27, %c1_28, %c0_29], %98 {strides = array<i32>} : memref<2x8x32xf32, #tpu.memory_space<vmem>>, vector<2x1x32xf32>,
    %c8_i32_30 = arith.constant 8 : i32
    %99 = arith.muli %arg0, %c8_i32_30 : i32
    %c2_i32 = arith.constant 2 : i32
    %100 = arith.addi %99, %c2_i32 : i32
    %c0_31 = arith.constant 0 : index
    %c2 = arith.constant 2 : index
    %c0_32 = arith.constant 0 : index
    %101 = vector.load %arg2[%c0_31, %c2, %c0_32] : memref<2x8x128xf32, #tpu.memory_space<vmem>>, vector<2x1x128xf32>
    %102 = vector.shape_cast %101 : vector<2x1x128xf32> to vector<2x128xf32>
    %cst_33 = arith.constant dense<0.000000e+00> : vector<2x128xf32>
    %103 = tpu.matmul %88, %4, %cst_33 {dimension_numbers = #tpu.dot_dimension_numbers<[1], [0], [0], [1], [0, 0, 1, 1], [], []>} : vector<2x32xf32>, vector<32x128xf32>, vector<2x128xf32> -> vector<2x128xf32>
    %104 = arith.addf %102, %103 : vector<2x128xf32>
    %105 = vector.extract_strided_slice %104 {offsets = [0, 0], sizes = [2, 32], strides = [1, 1]} : vector<2x128xf32> to vector<2x32xf32>
    %106 = arith.negf %105 : vector<2x32xf32>
    %107 = math.exp %106 : vector<2x32xf32>
    %cst_34 = arith.constant 1.000000e+00 : f32
    %108 = vector.broadcast %cst_34 : f32 to vector<2x32xf32>
    %109 = arith.addf %108, %107 : vector<2x32xf32>
    %110 = arith.divf %108, %109 : vector<2x32xf32>
    %111 = vector.extract_strided_slice %104 {offsets = [0, 32], sizes = [2, 32], strides = [1, 1]} : vector<2x128xf32> to vector<2x32xf32>
    %112 = arith.negf %111 : vector<2x32xf32>
    %113 = math.exp %112 : vector<2x32xf32>
    %cst_35 = arith.constant 1.000000e+00 : f32
    %114 = vector.broadcast %cst_35 : f32 to vector<2x32xf32>
    %115 = arith.addf %114, %113 : vector<2x32xf32>
    %116 = arith.divf %114, %115 : vector<2x32xf32>
    %117 = vector.extract_strided_slice %104 {offsets = [0, 64], sizes = [2, 32], strides = [1, 1]} : vector<2x128xf32> to vector<2x32xf32>
    %118 = math.tanh %117 : vector<2x32xf32>
    %119 = vector.extract_strided_slice %104 {offsets = [0, 96], sizes = [2, 32], strides = [1, 1]} : vector<2x128xf32> to vector<2x32xf32>
    %120 = arith.negf %119 : vector<2x32xf32>
    %121 = math.exp %120 : vector<2x32xf32>
    %cst_36 = arith.constant 1.000000e+00 : f32
    %122 = vector.broadcast %cst_36 : f32 to vector<2x32xf32>
    %123 = arith.addf %122, %121 : vector<2x32xf32>
    %124 = arith.divf %122, %123 : vector<2x32xf32>
    %125 = arith.mulf %116, %91 : vector<2x32xf32>
    %126 = arith.mulf %110, %118 : vector<2x32xf32>
    %127 = arith.addf %125, %126 : vector<2x32xf32>
    %128 = math.tanh %127 : vector<2x32xf32>
    %129 = arith.mulf %124, %128 : vector<2x32xf32>
    %130 = vector.broadcast %100 : i32 to vector<2x1xi32>
    %131 = arith.cmpi slt, %130, %3 : vector<2x1xi32>
    %132 = vector.shape_cast %131 : vector<2x1xi1> to vector<2x1xi1>
    %133 = vector.broadcast %132 : vector<2x1xi1> to vector<2x32xi1>
    %134 = arith.select %133, %129, %88 : vector<2x32xi1>, vector<2x32xf32>
    %135 = vector.shape_cast %131 : vector<2x1xi1> to vector<2x1xi1>
    %136 = vector.broadcast %135 : vector<2x1xi1> to vector<2x32xi1>
    %137 = arith.select %136, %127, %91 : vector<2x32xi1>, vector<2x32xf32>
    %cst_37 = arith.constant 0.000000e+00 : f32
    %138 = vector.shape_cast %131 : vector<2x1xi1> to vector<2x1xi1>
    %139 = vector.broadcast %138 : vector<2x1xi1> to vector<2x32xi1>
    %140 = vector.broadcast %cst_37 : f32 to vector<2x32xf32>
    %141 = arith.select %139, %129, %140 : vector<2x32xi1>, vector<2x32xf32>
    %c0_38 = arith.constant 0 : index
    %c2_39 = arith.constant 2 : index
    %c0_40 = arith.constant 0 : index
    %142 = vector.load %arg4[%c0_38, %c2_39, %c0_40] : memref<2x8x32xf32, #tpu.memory_space<vmem>>, vector<2x1x32xf32>
    %143 = vector.shape_cast %142 : vector<2x1x32xf32> to vector<2x32xf32>
    %144 = vector.shape_cast %141 : vector<2x32xf32> to vector<2x1x32xf32>
    tpu.vector_store %arg4[%c0_38, %c2_39, %c0_40], %144 {strides = array<i32>} : memref<2x8x32xf32, #tpu.memory_space<vmem>>, vector<2x1x32xf32>,
    %c8_i32_41 = arith.constant 8 : i32
    %145 = arith.muli %arg0, %c8_i32_41 : i32
    %c3_i32 = arith.constant 3 : i32
    %146 = arith.addi %145, %c3_i32 : i32
    %c0_42 = arith.constant 0 : index
    %c3 = arith.constant 3 : index
    %c0_43 = arith.constant 0 : index
    %147 = vector.load %arg2[%c0_42, %c3, %c0_43] : memref<2x8x128xf32, #tpu.memory_space<vmem>>, vector<2x1x128xf32>
    %148 = vector.shape_cast %147 : vector<2x1x128xf32> to vector<2x128xf32>
    %cst_44 = arith.constant dense<0.000000e+00> : vector<2x128xf32>
    %149 = tpu.matmul %134, %4, %cst_44 {dimension_numbers = #tpu.dot_dimension_numbers<[1], [0], [0], [1], [0, 0, 1, 1], [], []>} : vector<2x32xf32>, vector<32x128xf32>, vector<2x128xf32> -> vector<2x128xf32>
    %150 = arith.addf %148, %149 : vector<2x128xf32>
    %151 = vector.extract_strided_slice %150 {offsets = [0, 0], sizes = [2, 32], strides = [1, 1]} : vector<2x128xf32> to vector<2x32xf32>
    %152 = arith.negf %151 : vector<2x32xf32>
    %153 = math.exp %152 : vector<2x32xf32>
    %cst_45 = arith.constant 1.000000e+00 : f32
    %154 = vector.broadcast %cst_45 : f32 to vector<2x32xf32>
    %155 = arith.addf %154, %153 : vector<2x32xf32>
    %156 = arith.divf %154, %155 : vector<2x32xf32>
    %157 = vector.extract_strided_slice %150 {offsets = [0, 32], sizes = [2, 32], strides = [1, 1]} : vector<2x128xf32> to vector<2x32xf32>
    %158 = arith.negf %157 : vector<2x32xf32>
    %159 = math.exp %158 : vector<2x32xf32>
    %cst_46 = arith.constant 1.000000e+00 : f32
    %160 = vector.broadcast %cst_46 : f32 to vector<2x32xf32>
    %161 = arith.addf %160, %159 : vector<2x32xf32>
    %162 = arith.divf %160, %161 : vector<2x32xf32>
    %163 = vector.extract_strided_slice %150 {offsets = [0, 64], sizes = [2, 32], strides = [1, 1]} : vector<2x128xf32> to vector<2x32xf32>
    %164 = math.tanh %163 : vector<2x32xf32>
    %165 = vector.extract_strided_slice %150 {offsets = [0, 96], sizes = [2, 32], strides = [1, 1]} : vector<2x128xf32> to vector<2x32xf32>
    %166 = arith.negf %165 : vector<2x32xf32>
    %167 = math.exp %166 : vector<2x32xf32>
    %cst_47 = arith.constant 1.000000e+00 : f32
    %168 = vector.broadcast %cst_47 : f32 to vector<2x32xf32>
    %169 = arith.addf %168, %167 : vector<2x32xf32>
    %170 = arith.divf %168, %169 : vector<2x32xf32>
    %171 = arith.mulf %162, %137 : vector<2x32xf32>
    %172 = arith.mulf %156, %164 : vector<2x32xf32>
    %173 = arith.addf %171, %172 : vector<2x32xf32>
    %174 = math.tanh %173 : vector<2x32xf32>
    %175 = arith.mulf %170, %174 : vector<2x32xf32>
    %176 = vector.broadcast %146 : i32 to vector<2x1xi32>
    %177 = arith.cmpi slt, %176, %3 : vector<2x1xi32>
    %178 = vector.shape_cast %177 : vector<2x1xi1> to vector<2x1xi1>
    %179 = vector.broadcast %178 : vector<2x1xi1> to vector<2x32xi1>
    %180 = arith.select %179, %175, %134 : vector<2x32xi1>, vector<2x32xf32>
    %181 = vector.shape_cast %177 : vector<2x1xi1> to vector<2x1xi1>
    %182 = vector.broadcast %181 : vector<2x1xi1> to vector<2x32xi1>
    %183 = arith.select %182, %173, %137 : vector<2x32xi1>, vector<2x32xf32>
    %cst_48 = arith.constant 0.000000e+00 : f32
    %184 = vector.shape_cast %177 : vector<2x1xi1> to vector<2x1xi1>
    %185 = vector.broadcast %184 : vector<2x1xi1> to vector<2x32xi1>
    %186 = vector.broadcast %cst_48 : f32 to vector<2x32xf32>
    %187 = arith.select %185, %175, %186 : vector<2x32xi1>, vector<2x32xf32>
    %c0_49 = arith.constant 0 : index
    %c3_50 = arith.constant 3 : index
    %c0_51 = arith.constant 0 : index
    %188 = vector.load %arg4[%c0_49, %c3_50, %c0_51] : memref<2x8x32xf32, #tpu.memory_space<vmem>>, vector<2x1x32xf32>
    %189 = vector.shape_cast %188 : vector<2x1x32xf32> to vector<2x32xf32>
    %190 = vector.shape_cast %187 : vector<2x32xf32> to vector<2x1x32xf32>
    tpu.vector_store %arg4[%c0_49, %c3_50, %c0_51], %190 {strides = array<i32>} : memref<2x8x32xf32, #tpu.memory_space<vmem>>, vector<2x1x32xf32>,
    %c8_i32_52 = arith.constant 8 : i32
    %191 = arith.muli %arg0, %c8_i32_52 : i32
    %c4_i32 = arith.constant 4 : i32
    %192 = arith.addi %191, %c4_i32 : i32
    %c0_53 = arith.constant 0 : index
    %c4 = arith.constant 4 : index
    %c0_54 = arith.constant 0 : index
    %193 = vector.load %arg2[%c0_53, %c4, %c0_54] : memref<2x8x128xf32, #tpu.memory_space<vmem>>, vector<2x1x128xf32>
    %194 = vector.shape_cast %193 : vector<2x1x128xf32> to vector<2x128xf32>
    %cst_55 = arith.constant dense<0.000000e+00> : vector<2x128xf32>
    %195 = tpu.matmul %180, %4, %cst_55 {dimension_numbers = #tpu.dot_dimension_numbers<[1], [0], [0], [1], [0, 0, 1, 1], [], []>} : vector<2x32xf32>, vector<32x128xf32>, vector<2x128xf32> -> vector<2x128xf32>
    %196 = arith.addf %194, %195 : vector<2x128xf32>
    %197 = vector.extract_strided_slice %196 {offsets = [0, 0], sizes = [2, 32], strides = [1, 1]} : vector<2x128xf32> to vector<2x32xf32>
    %198 = arith.negf %197 : vector<2x32xf32>
    %199 = math.exp %198 : vector<2x32xf32>
    %cst_56 = arith.constant 1.000000e+00 : f32
    %200 = vector.broadcast %cst_56 : f32 to vector<2x32xf32>
    %201 = arith.addf %200, %199 : vector<2x32xf32>
    %202 = arith.divf %200, %201 : vector<2x32xf32>
    %203 = vector.extract_strided_slice %196 {offsets = [0, 32], sizes = [2, 32], strides = [1, 1]} : vector<2x128xf32> to vector<2x32xf32>
    %204 = arith.negf %203 : vector<2x32xf32>
    %205 = math.exp %204 : vector<2x32xf32>
    %cst_57 = arith.constant 1.000000e+00 : f32
    %206 = vector.broadcast %cst_57 : f32 to vector<2x32xf32>
    %207 = arith.addf %206, %205 : vector<2x32xf32>
    %208 = arith.divf %206, %207 : vector<2x32xf32>
    %209 = vector.extract_strided_slice %196 {offsets = [0, 64], sizes = [2, 32], strides = [1, 1]} : vector<2x128xf32> to vector<2x32xf32>
    %210 = math.tanh %209 : vector<2x32xf32>
    %211 = vector.extract_strided_slice %196 {offsets = [0, 96], sizes = [2, 32], strides = [1, 1]} : vector<2x128xf32> to vector<2x32xf32>
    %212 = arith.negf %211 : vector<2x32xf32>
    %213 = math.exp %212 : vector<2x32xf32>
    %cst_58 = arith.constant 1.000000e+00 : f32
    %214 = vector.broadcast %cst_58 : f32 to vector<2x32xf32>
    %215 = arith.addf %214, %213 : vector<2x32xf32>
    %216 = arith.divf %214, %215 : vector<2x32xf32>
    %217 = arith.mulf %208, %183 : vector<2x32xf32>
    %218 = arith.mulf %202, %210 : vector<2x32xf32>
    %219 = arith.addf %217, %218 : vector<2x32xf32>
    %220 = math.tanh %219 : vector<2x32xf32>
    %221 = arith.mulf %216, %220 : vector<2x32xf32>
    %222 = vector.broadcast %192 : i32 to vector<2x1xi32>
    %223 = arith.cmpi slt, %222, %3 : vector<2x1xi32>
    %224 = vector.shape_cast %223 : vector<2x1xi1> to vector<2x1xi1>
    %225 = vector.broadcast %224 : vector<2x1xi1> to vector<2x32xi1>
    %226 = arith.select %225, %221, %180 : vector<2x32xi1>, vector<2x32xf32>
    %227 = vector.shape_cast %223 : vector<2x1xi1> to vector<2x1xi1>
    %228 = vector.broadcast %227 : vector<2x1xi1> to vector<2x32xi1>
    %229 = arith.select %228, %219, %183 : vector<2x32xi1>, vector<2x32xf32>
    %cst_59 = arith.constant 0.000000e+00 : f32
    %230 = vector.shape_cast %223 : vector<2x1xi1> to vector<2x1xi1>
    %231 = vector.broadcast %230 : vector<2x1xi1> to vector<2x32xi1>
    %232 = vector.broadcast %cst_59 : f32 to vector<2x32xf32>
    %233 = arith.select %231, %221, %232 : vector<2x32xi1>, vector<2x32xf32>
    %c0_60 = arith.constant 0 : index
    %c4_61 = arith.constant 4 : index
    %c0_62 = arith.constant 0 : index
    %234 = vector.load %arg4[%c0_60, %c4_61, %c0_62] : memref<2x8x32xf32, #tpu.memory_space<vmem>>, vector<2x1x32xf32>
    %235 = vector.shape_cast %234 : vector<2x1x32xf32> to vector<2x32xf32>
    %236 = vector.shape_cast %233 : vector<2x32xf32> to vector<2x1x32xf32>
    tpu.vector_store %arg4[%c0_60, %c4_61, %c0_62], %236 {strides = array<i32>} : memref<2x8x32xf32, #tpu.memory_space<vmem>>, vector<2x1x32xf32>,
    %c8_i32_63 = arith.constant 8 : i32
    %237 = arith.muli %arg0, %c8_i32_63 : i32
    %c5_i32 = arith.constant 5 : i32
    %238 = arith.addi %237, %c5_i32 : i32
    %c0_64 = arith.constant 0 : index
    %c5 = arith.constant 5 : index
    %c0_65 = arith.constant 0 : index
    %239 = vector.load %arg2[%c0_64, %c5, %c0_65] : memref<2x8x128xf32, #tpu.memory_space<vmem>>, vector<2x1x128xf32>
    %240 = vector.shape_cast %239 : vector<2x1x128xf32> to vector<2x128xf32>
    %cst_66 = arith.constant dense<0.000000e+00> : vector<2x128xf32>
    %241 = tpu.matmul %226, %4, %cst_66 {dimension_numbers = #tpu.dot_dimension_numbers<[1], [0], [0], [1], [0, 0, 1, 1], [], []>} : vector<2x32xf32>, vector<32x128xf32>, vector<2x128xf32> -> vector<2x128xf32>
    %242 = arith.addf %240, %241 : vector<2x128xf32>
    %243 = vector.extract_strided_slice %242 {offsets = [0, 0], sizes = [2, 32], strides = [1, 1]} : vector<2x128xf32> to vector<2x32xf32>
    %244 = arith.negf %243 : vector<2x32xf32>
    %245 = math.exp %244 : vector<2x32xf32>
    %cst_67 = arith.constant 1.000000e+00 : f32
    %246 = vector.broadcast %cst_67 : f32 to vector<2x32xf32>
    %247 = arith.addf %246, %245 : vector<2x32xf32>
    %248 = arith.divf %246, %247 : vector<2x32xf32>
    %249 = vector.extract_strided_slice %242 {offsets = [0, 32], sizes = [2, 32], strides = [1, 1]} : vector<2x128xf32> to vector<2x32xf32>
    %250 = arith.negf %249 : vector<2x32xf32>
    %251 = math.exp %250 : vector<2x32xf32>
    %cst_68 = arith.constant 1.000000e+00 : f32
    %252 = vector.broadcast %cst_68 : f32 to vector<2x32xf32>
    %253 = arith.addf %252, %251 : vector<2x32xf32>
    %254 = arith.divf %252, %253 : vector<2x32xf32>
    %255 = vector.extract_strided_slice %242 {offsets = [0, 64], sizes = [2, 32], strides = [1, 1]} : vector<2x128xf32> to vector<2x32xf32>
    %256 = math.tanh %255 : vector<2x32xf32>
    %257 = vector.extract_strided_slice %242 {offsets = [0, 96], sizes = [2, 32], strides = [1, 1]} : vector<2x128xf32> to vector<2x32xf32>
    %258 = arith.negf %257 : vector<2x32xf32>
    %259 = math.exp %258 : vector<2x32xf32>
    %cst_69 = arith.constant 1.000000e+00 : f32
    %260 = vector.broadcast %cst_69 : f32 to vector<2x32xf32>
    %261 = arith.addf %260, %259 : vector<2x32xf32>
    %262 = arith.divf %260, %261 : vector<2x32xf32>
    %263 = arith.mulf %254, %229 : vector<2x32xf32>
    %264 = arith.mulf %248, %256 : vector<2x32xf32>
    %265 = arith.addf %263, %264 : vector<2x32xf32>
    %266 = math.tanh %265 : vector<2x32xf32>
    %267 = arith.mulf %262, %266 : vector<2x32xf32>
    %268 = vector.broadcast %238 : i32 to vector<2x1xi32>
    %269 = arith.cmpi slt, %268, %3 : vector<2x1xi32>
    %270 = vector.shape_cast %269 : vector<2x1xi1> to vector<2x1xi1>
    %271 = vector.broadcast %270 : vector<2x1xi1> to vector<2x32xi1>
    %272 = arith.select %271, %267, %226 : vector<2x32xi1>, vector<2x32xf32>
    %273 = vector.shape_cast %269 : vector<2x1xi1> to vector<2x1xi1>
    %274 = vector.broadcast %273 : vector<2x1xi1> to vector<2x32xi1>
    %275 = arith.select %274, %265, %229 : vector<2x32xi1>, vector<2x32xf32>
    %cst_70 = arith.constant 0.000000e+00 : f32
    %276 = vector.shape_cast %269 : vector<2x1xi1> to vector<2x1xi1>
    %277 = vector.broadcast %276 : vector<2x1xi1> to vector<2x32xi1>
    %278 = vector.broadcast %cst_70 : f32 to vector<2x32xf32>
    %279 = arith.select %277, %267, %278 : vector<2x32xi1>, vector<2x32xf32>
    %c0_71 = arith.constant 0 : index
    %c5_72 = arith.constant 5 : index
    %c0_73 = arith.constant 0 : index
    %280 = vector.load %arg4[%c0_71, %c5_72, %c0_73] : memref<2x8x32xf32, #tpu.memory_space<vmem>>, vector<2x1x32xf32>
    %281 = vector.shape_cast %280 : vector<2x1x32xf32> to vector<2x32xf32>
    %282 = vector.shape_cast %279 : vector<2x32xf32> to vector<2x1x32xf32>
    tpu.vector_store %arg4[%c0_71, %c5_72, %c0_73], %282 {strides = array<i32>} : memref<2x8x32xf32, #tpu.memory_space<vmem>>, vector<2x1x32xf32>,
    %c8_i32_74 = arith.constant 8 : i32
    %283 = arith.muli %arg0, %c8_i32_74 : i32
    %c6_i32 = arith.constant 6 : i32
    %284 = arith.addi %283, %c6_i32 : i32
    %c0_75 = arith.constant 0 : index
    %c6 = arith.constant 6 : index
    %c0_76 = arith.constant 0 : index
    %285 = vector.load %arg2[%c0_75, %c6, %c0_76] : memref<2x8x128xf32, #tpu.memory_space<vmem>>, vector<2x1x128xf32>
    %286 = vector.shape_cast %285 : vector<2x1x128xf32> to vector<2x128xf32>
    %cst_77 = arith.constant dense<0.000000e+00> : vector<2x128xf32>
    %287 = tpu.matmul %272, %4, %cst_77 {dimension_numbers = #tpu.dot_dimension_numbers<[1], [0], [0], [1], [0, 0, 1, 1], [], []>} : vector<2x32xf32>, vector<32x128xf32>, vector<2x128xf32> -> vector<2x128xf32>
    %288 = arith.addf %286, %287 : vector<2x128xf32>
    %289 = vector.extract_strided_slice %288 {offsets = [0, 0], sizes = [2, 32], strides = [1, 1]} : vector<2x128xf32> to vector<2x32xf32>
    %290 = arith.negf %289 : vector<2x32xf32>
    %291 = math.exp %290 : vector<2x32xf32>
    %cst_78 = arith.constant 1.000000e+00 : f32
    %292 = vector.broadcast %cst_78 : f32 to vector<2x32xf32>
    %293 = arith.addf %292, %291 : vector<2x32xf32>
    %294 = arith.divf %292, %293 : vector<2x32xf32>
    %295 = vector.extract_strided_slice %288 {offsets = [0, 32], sizes = [2, 32], strides = [1, 1]} : vector<2x128xf32> to vector<2x32xf32>
    %296 = arith.negf %295 : vector<2x32xf32>
    %297 = math.exp %296 : vector<2x32xf32>
    %cst_79 = arith.constant 1.000000e+00 : f32
    %298 = vector.broadcast %cst_79 : f32 to vector<2x32xf32>
    %299 = arith.addf %298, %297 : vector<2x32xf32>
    %300 = arith.divf %298, %299 : vector<2x32xf32>
    %301 = vector.extract_strided_slice %288 {offsets = [0, 64], sizes = [2, 32], strides = [1, 1]} : vector<2x128xf32> to vector<2x32xf32>
    %302 = math.tanh %301 : vector<2x32xf32>
    %303 = vector.extract_strided_slice %288 {offsets = [0, 96], sizes = [2, 32], strides = [1, 1]} : vector<2x128xf32> to vector<2x32xf32>
    %304 = arith.negf %303 : vector<2x32xf32>
    %305 = math.exp %304 : vector<2x32xf32>
    %cst_80 = arith.constant 1.000000e+00 : f32
    %306 = vector.broadcast %cst_80 : f32 to vector<2x32xf32>
    %307 = arith.addf %306, %305 : vector<2x32xf32>
    %308 = arith.divf %306, %307 : vector<2x32xf32>
    %309 = arith.mulf %300, %275 : vector<2x32xf32>
    %310 = arith.mulf %294, %302 : vector<2x32xf32>
    %311 = arith.addf %309, %310 : vector<2x32xf32>
    %312 = math.tanh %311 : vector<2x32xf32>
    %313 = arith.mulf %308, %312 : vector<2x32xf32>
    %314 = vector.broadcast %284 : i32 to vector<2x1xi32>
    %315 = arith.cmpi slt, %314, %3 : vector<2x1xi32>
    %316 = vector.shape_cast %315 : vector<2x1xi1> to vector<2x1xi1>
    %317 = vector.broadcast %316 : vector<2x1xi1> to vector<2x32xi1>
    %318 = arith.select %317, %313, %272 : vector<2x32xi1>, vector<2x32xf32>
    %319 = vector.shape_cast %315 : vector<2x1xi1> to vector<2x1xi1>
    %320 = vector.broadcast %319 : vector<2x1xi1> to vector<2x32xi1>
    %321 = arith.select %320, %311, %275 : vector<2x32xi1>, vector<2x32xf32>
    %cst_81 = arith.constant 0.000000e+00 : f32
    %322 = vector.shape_cast %315 : vector<2x1xi1> to vector<2x1xi1>
    %323 = vector.broadcast %322 : vector<2x1xi1> to vector<2x32xi1>
    %324 = vector.broadcast %cst_81 : f32 to vector<2x32xf32>
    %325 = arith.select %323, %313, %324 : vector<2x32xi1>, vector<2x32xf32>
    %c0_82 = arith.constant 0 : index
    %c6_83 = arith.constant 6 : index
    %c0_84 = arith.constant 0 : index
    %326 = vector.load %arg4[%c0_82, %c6_83, %c0_84] : memref<2x8x32xf32, #tpu.memory_space<vmem>>, vector<2x1x32xf32>
    %327 = vector.shape_cast %326 : vector<2x1x32xf32> to vector<2x32xf32>
    %328 = vector.shape_cast %325 : vector<2x32xf32> to vector<2x1x32xf32>
    tpu.vector_store %arg4[%c0_82, %c6_83, %c0_84], %328 {strides = array<i32>} : memref<2x8x32xf32, #tpu.memory_space<vmem>>, vector<2x1x32xf32>,
    %c8_i32_85 = arith.constant 8 : i32
    %329 = arith.muli %arg0, %c8_i32_85 : i32
    %c7_i32 = arith.constant 7 : i32
    %330 = arith.addi %329, %c7_i32 : i32
    %c0_86 = arith.constant 0 : index
    %c7 = arith.constant 7 : index
    %c0_87 = arith.constant 0 : index
    %331 = vector.load %arg2[%c0_86, %c7, %c0_87] : memref<2x8x128xf32, #tpu.memory_space<vmem>>, vector<2x1x128xf32>
    %332 = vector.shape_cast %331 : vector<2x1x128xf32> to vector<2x128xf32>
    %cst_88 = arith.constant dense<0.000000e+00> : vector<2x128xf32>
    %333 = tpu.matmul %318, %4, %cst_88 {dimension_numbers = #tpu.dot_dimension_numbers<[1], [0], [0], [1], [0, 0, 1, 1], [], []>} : vector<2x32xf32>, vector<32x128xf32>, vector<2x128xf32> -> vector<2x128xf32>
    %334 = arith.addf %332, %333 : vector<2x128xf32>
    %335 = vector.extract_strided_slice %334 {offsets = [0, 0], sizes = [2, 32], strides = [1, 1]} : vector<2x128xf32> to vector<2x32xf32>
    %336 = arith.negf %335 : vector<2x32xf32>
    %337 = math.exp %336 : vector<2x32xf32>
    %cst_89 = arith.constant 1.000000e+00 : f32
    %338 = vector.broadcast %cst_89 : f32 to vector<2x32xf32>
    %339 = arith.addf %338, %337 : vector<2x32xf32>
    %340 = arith.divf %338, %339 : vector<2x32xf32>
    %341 = vector.extract_strided_slice %334 {offsets = [0, 32], sizes = [2, 32], strides = [1, 1]} : vector<2x128xf32> to vector<2x32xf32>
    %342 = arith.negf %341 : vector<2x32xf32>
    %343 = math.exp %342 : vector<2x32xf32>
    %cst_90 = arith.constant 1.000000e+00 : f32
    %344 = vector.broadcast %cst_90 : f32 to vector<2x32xf32>
    %345 = arith.addf %344, %343 : vector<2x32xf32>
    %346 = arith.divf %344, %345 : vector<2x32xf32>
    %347 = vector.extract_strided_slice %334 {offsets = [0, 64], sizes = [2, 32], strides = [1, 1]} : vector<2x128xf32> to vector<2x32xf32>
    %348 = math.tanh %347 : vector<2x32xf32>
    %349 = vector.extract_strided_slice %334 {offsets = [0, 96], sizes = [2, 32], strides = [1, 1]} : vector<2x128xf32> to vector<2x32xf32>
    %350 = arith.negf %349 : vector<2x32xf32>
    %351 = math.exp %350 : vector<2x32xf32>
    %cst_91 = arith.constant 1.000000e+00 : f32
    %352 = vector.broadcast %cst_91 : f32 to vector<2x32xf32>
    %353 = arith.addf %352, %351 : vector<2x32xf32>
    %354 = arith.divf %352, %353 : vector<2x32xf32>
    %355 = arith.mulf %346, %321 : vector<2x32xf32>
    %356 = arith.mulf %340, %348 : vector<2x32xf32>
    %357 = arith.addf %355, %356 : vector<2x32xf32>
    %358 = math.tanh %357 : vector<2x32xf32>
    %359 = arith.mulf %354, %358 : vector<2x32xf32>
    %360 = vector.broadcast %330 : i32 to vector<2x1xi32>
    %361 = arith.cmpi slt, %360, %3 : vector<2x1xi32>
    %362 = vector.shape_cast %361 : vector<2x1xi1> to vector<2x1xi1>
    %363 = vector.broadcast %362 : vector<2x1xi1> to vector<2x32xi1>
    %364 = arith.select %363, %359, %318 : vector<2x32xi1>, vector<2x32xf32>
    %365 = vector.shape_cast %361 : vector<2x1xi1> to vector<2x1xi1>
    %366 = vector.broadcast %365 : vector<2x1xi1> to vector<2x32xi1>
    %367 = arith.select %366, %357, %321 : vector<2x32xi1>, vector<2x32xf32>
    %cst_92 = arith.constant 0.000000e+00 : f32
    %368 = vector.shape_cast %361 : vector<2x1xi1> to vector<2x1xi1>
    %369 = vector.broadcast %368 : vector<2x1xi1> to vector<2x32xi1>
    %370 = vector.broadcast %cst_92 : f32 to vector<2x32xf32>
    %371 = arith.select %369, %359, %370 : vector<2x32xi1>, vector<2x32xf32>
    %c0_93 = arith.constant 0 : index
    %c7_94 = arith.constant 7 : index
    %c0_95 = arith.constant 0 : index
    %372 = vector.load %arg4[%c0_93, %c7_94, %c0_95] : memref<2x8x32xf32, #tpu.memory_space<vmem>>, vector<2x1x32xf32>
    %373 = vector.shape_cast %372 : vector<2x1x32xf32> to vector<2x32xf32>
    %374 = vector.shape_cast %371 : vector<2x32xf32> to vector<2x1x32xf32>
    tpu.vector_store %arg4[%c0_93, %c7_94, %c0_95], %374 {strides = array<i32>} : memref<2x8x32xf32, #tpu.memory_space<vmem>>, vector<2x1x32xf32>,
    %c0_96 = arith.constant 0 : index
    %c0_97 = arith.constant 0 : index
    %375 = vector.load %arg7[%c0_96, %c0_97] : memref<2x32xf32, #tpu.memory_space<vmem>>, vector<2x32xf32>
    tpu.vector_store %arg7[%c0_96, %c0_97], %364 {strides = array<i32>} : memref<2x32xf32, #tpu.memory_space<vmem>>, vector<2x32xf32>,
    %c0_98 = arith.constant 0 : index
    %c0_99 = arith.constant 0 : index
    %376 = vector.load %arg8[%c0_98, %c0_99] : memref<2x32xf32, #tpu.memory_space<vmem>>, vector<2x32xf32>
    tpu.vector_store %arg8[%c0_98, %c0_99], %367 {strides = array<i32>} : memref<2x32xf32, #tpu.memory_space<vmem>>, vector<2x32xf32>,
    %c0_i32_100 = arith.constant 0 : i32
    %377 = arith.cmpi eq, %arg0, %c0_i32_100 : i32
    %378 = arith.extui %377 : i1 to i32
    %c0_i32_101 = arith.constant 0 : i32
    %379 = arith.cmpi ne, %378, %c0_i32_101 : i32
    scf.if %379 {
      %c0_102 = arith.constant 0 : index
      %c0_103 = arith.constant 0 : index
      %380 = vector.load %arg5[%c0_102, %c0_103] : memref<2x32xf32, #tpu.memory_space<vmem>>, vector<2x32xf32>
      tpu.vector_store %arg5[%c0_102, %c0_103], %364 {strides = array<i32>} : memref<2x32xf32, #tpu.memory_space<vmem>>, vector<2x32xf32>,
      %c0_104 = arith.constant 0 : index
      %c0_105 = arith.constant 0 : index
      %381 = vector.load %arg6[%c0_104, %c0_105] : memref<2x32xf32, #tpu.memory_space<vmem>>, vector<2x32xf32>
      tpu.vector_store %arg6[%c0_104, %c0_105], %367 {strides = array<i32>} : memref<2x32xf32, #tpu.memory_space<vmem>>, vector<2x32xf32>,
    } else {
    }
    return
  }
  func.func @transform_0(%arg0: i32) -> (i32, i32) {
    %c0_i32 = arith.constant 0 : i32
    %c0_i32_0 = arith.constant 0 : i32
    %c0_i32_1 = arith.constant 0 : i32
    return %c0_i32, %c0_i32_0 : i32, i32
  }
  func.func @transform_1(%arg0: i32) -> (i32, i32, i32) {
    %c0_i32 = arith.constant 0 : i32
    %c0_i32_0 = arith.constant 0 : i32
    %c0_i32_1 = arith.constant 0 : i32
    return %c0_i32, %arg0, %c0_i32_0 : i32, i32, i32
  }
  func.func @transform_2(%arg0: i32) -> (i32, i32) {
    %c0_i32 = arith.constant 0 : i32
    %c0_i32_0 = arith.constant 0 : i32
    %c0_i32_1 = arith.constant 0 : i32
    return %c0_i32, %c0_i32_0 : i32, i32
  }
  func.func @transform_3(%arg0: i32) -> (i32, i32, i32) {
    %c0_i32 = arith.constant 0 : i32
    %c0_i32_0 = arith.constant 0 : i32
    %c0_i32_1 = arith.constant 0 : i32
    return %c0_i32, %arg0, %c0_i32_0 : i32, i32, i32
  }
  func.func @transform_4(%arg0: i32) -> (i32, i32) {
    %c0_i32 = arith.constant 0 : i32
    %c0_i32_0 = arith.constant 0 : i32
    %c0_i32_1 = arith.constant 0 : i32
    return %c0_i32, %c0_i32_0 : i32, i32
  }
  func.func @transform_5(%arg0: i32) -> (i32, i32) {
    %c0_i32 = arith.constant 0 : i32
    %c0_i32_0 = arith.constant 0 : i32
    %c0_i32_1 = arith.constant 0 : i32
    return %c0_i32, %c0_i32_0 : i32, i32
  }
}

</mosaic_0001>

<llo_original>
// kernel: tpu_custom_call.1
$region0: #{tpu_custom_call.1}
  #allocation0 [shape = 'u32[]', space=smem, size = 0x4, offset = 0x4, fixed_abs, tag = 'smem constant byte address 0x4 - core index']
  #allocation1 [shape = 'u32[144,128]{1,0:T(1,128)}', space=vmem, size = 0x12000, scoped, tag = 'internal scratch']
  #allocation2 [shape = 'f32[2,32]{1,0:T(2,128)}', space=vmem, size = 0x400, scoped, tag = 'scratch operand']
  #allocation3 [shape = 'f32[2,32]{1,0:T(2,128)}', space=vmem, size = 0x400, scoped, tag = 'scratch operand']
  %s0 = inlined_call_operand.vmem [shape: s32[2,1], index: 0, kind: input, shape index: {}]
  %s1 = inlined_call_operand.hbm [shape: f32[2,8,128], index: 1, kind: input, shape index: {}]
  %s2 = inlined_call_operand.hbm [shape: f32[32,128], index: 2, kind: input, shape index: {}]
  %s3 = inlined_call_operand.hbm [shape: f32[2,8,32], index: 3, kind: output, shape index: {0}]
  %s4 = inlined_call_operand.hbm [shape: f32[2,32], index: 4, kind: output, shape index: {1}]
  %s5 = inlined_call_operand.hbm [shape: f32[2,32], index: 5, kind: output, shape index: {2}]
  %6 = xla_tuple %s3, %s4, %s5
  %s7 = sld [smem:[#allocation0]]
  $region54: #{tpu_custom_call.1} parent=0
    _
  %s9 = ssub.s32 1, %s7
  %s10 = scalar_select 0, %s9, %s7
  $region1: #{tpu_custom_call.1} parent=0
    #allocation4 [shape = 'u8[8192]{0}', space=vmem, size = 0x2000, scoped, tag = 'input window, operand 1, single buffered']
    #allocation5 [shape = 's32[1]{0}', space=sflag, size = 0x4, scoped, tag = 'scoped memory for tpu_custom_call.1']
    #allocation6 [shape = 's32[1]{0}', space=sflag, size = 0x4, scoped, tag = 'scoped memory for tpu_custom_call.1']
    #allocation7 [shape = 'u8[16384]{0}', space=vmem, size = 0x4000, scoped, tag = 'input window, operand 2, single buffered']
    #allocation8 [shape = 's32[1]{0}', space=sflag, size = 0x4, scoped, tag = 'scoped memory for tpu_custom_call.1']
    #allocation9 [shape = 'u8[8192]{0}', space=vmem, size = 0x2000, scoped, tag = 'output window, operand 0, single buffered']
    #allocation10 [shape = 'u8[1024]{0}', space=vmem, size = 0x400, scoped, tag = 'output window, operand 1, single buffered']
    #allocation11 [shape = 's32[1]{0}', space=sflag, size = 0x4, scoped, tag = 'scoped memory for tpu_custom_call.1']
    #allocation12 [shape = 'u8[1024]{0}', space=vmem, size = 0x400, scoped, tag = 'output window, operand 2, single buffered']
    %11 = vsyncpa [#allocation5], 0
    %12 = vsyncpa [#allocation8], 0
    %13 = vsyncpa [#allocation6], 0
    %14 = vsyncpa [#allocation11], 0
    // Predicated region
    $region2: #{tpu_custom_call.1} parent=1 // pred_check
      _
    $region3: #{tpu_custom_call.1} parent=1 // pred_check_branch
      %16 = sbr.rel (0) target = $region5
    $region4: #{tpu_custom_call.1} parent=1 // pred_region
      _
    $region5: #{tpu_custom_call.1} parent=1 // pred_fallthru
      _
    // Predicated region
    $region6: #{tpu_custom_call.1} parent=1 // pred_check
      _
    $region7: #{tpu_custom_call.1} parent=1 // pred_check_branch
      %18 = sbr.rel (0) target = $region9
    $region8: #{tpu_custom_call.1} parent=1 // pred_region
      %s20 = ssub.s32 256, 256
      %21 = vsyncadd [#allocation5], %s20
      %s22 = sshll.u32 [#allocation4], 4
      %s23 = int_to_ptr.vmem [resolvable:$true] %s22
      %28 = dma.hbm_to_vmem [thread:$0]  %s1, 256, %s23, [#allocation5], 128, 128, 8
    $region9: #{tpu_custom_call.1} parent=1 // pred_fallthru
      _
    // Predicated region
    $region10: #{tpu_custom_call.1} parent=1 // pred_check
      _
    $region11: #{tpu_custom_call.1} parent=1 // pred_check_branch
      %30 = sbr.rel (0) target = $region13
    $region12: #{tpu_custom_call.1} parent=1 // pred_region
      %s32 = ssub.s32 512, 512
      %33 = vsyncadd [#allocation8], %s32
      %s34 = sshll.u32 [#allocation7], 4
      %s35 = int_to_ptr.vmem [resolvable:$true] %s34
      %40 = dma.hbm_to_vmem [thread:$0]  %s2, 512, %s35, [#allocation8], 128, 128, 8
    $region13: #{tpu_custom_call.1} parent=1 // pred_fallthru
      _
    // Predicated region
    $region14: #{tpu_custom_call.1} parent=1 // pred_check
      _
    $region15: #{tpu_custom_call.1} parent=1 // pred_check_branch
      %42 = sbr.rel (0) target = $region17
    $region16: #{tpu_custom_call.1} parent=1 // pred_region
      %43 = dma.done [#allocation5], 256
    $region17: #{tpu_custom_call.1} parent=1 // pred_fallthru
      _
    // Predicated region
    $region18: #{tpu_custom_call.1} parent=1 // pred_check
      _
    $region19: #{tpu_custom_call.1} parent=1 // pred_check_branch
      %45 = sbr.rel (0) target = $region21
    $region20: #{tpu_custom_call.1} parent=1 // pred_region
      %46 = dma.done [#allocation8], 512
    $region21: #{tpu_custom_call.1} parent=1 // pred_fallthru
      _
    %p47 = scmp.eq.s32.totalorder 0, 0
    // Predicated region
    $region22: #{tpu_custom_call.1} parent=1 // pred_check
      %p48 = pneg %p47
    $region23: #{tpu_custom_call.1} parent=1 // pred_check_branch
      %50 = sbr.rel (%p48) target = $region25
    $region24: #{tpu_custom_call.1} parent=1 // pred_region
      %vm51 = vcmask 254976
      %52 = vst.msk [vmem:[#allocation2] sm:$0x3] %vm51, 0.0
      %53 = vst.msk [vmem:[#allocation3] sm:$0x3] %vm51, 0.0
    $region25: #{tpu_custom_call.1} parent=1 // pred_fallthru
      _
    %v54 = vld [vmem:[%s0] sm:$0x3]
    %v55 = vld [vmem:[#allocation7] sm:$0xff]
    %v56 = vld [vmem:[#allocation7 + $0x8] sm:$0xff]
    %v57 = vld [vmem:[#allocation7 + $0x10] sm:$0xff]
    %v58 = vld [vmem:[#allocation7 + $0x18] sm:$0xff]
    %v59 = vld [vmem:[#allocation2] sm:$0x3]
    %v60 = vld [vmem:[#allocation3] sm:$0x3]
    %s61 = smul.u32 0, 8
    %v62 = vld [vmem:[#allocation4] sm:$0x1]
    %v63 = vld [vmem:[#allocation4 + $0x8] sm:$0x1]
    %vm64 = vcmask 261120
    %v66 = vsel %vm64, %v59, 0
    %68 = vmatprep.subr.mxu0 0.0
    %69 = vmatpush1.msra.mxu0 0.0
    %70 = vmatprep.subr.mxu0 0.0
    %71 = vmatpush1.msra.mxu0 0.0
    %72 = vmatprep.subr.mxu0 0.0
    %73 = vmatpush1.msra.mxu0 0.0
    %74 = vmatprep.subr.mxu0 0.0
    %75 = vmatpush1.msra.mxu0 0.0
    %76 = vmatprep.subr.mxu0 0.0
    %77 = vmatpush1.msra.mxu0 0.0
    %78 = vmatprep.subr.mxu0 0.0
    %79 = vmatpush1.msra.mxu0 0.0
    %80 = vmatprep.subr.mxu0 0.0
    %81 = vmatpush1.msra.mxu0 0.0
    %82 = vmatprep.subr.mxu0 0.0
    %83 = vmatpush1.msra.mxu0 0.0
    %84 = vmatprep.subr.mxu0 0.0
    %85 = vmatpush1.msra.mxu0 0.0
    %86 = vmatprep.subr.mxu0 0.0
    %87 = vmatpush1.msra.mxu0 0.0
    %88 = vmatprep.subr.mxu0 0.0
    %89 = vmatpush1.msra.mxu0 0.0
    %90 = vmatprep.subr.mxu0 0.0
    %91 = vmatpush1.msra.mxu0 0.0
    %92 = vmatprep.subr.mxu0 0.0
    %93 = vmatpush1.msra.mxu0 %v58
    %94 = vmatprep.subr.mxu0 0.0
    %95 = vmatpush1.msra.mxu0 %v57
    %96 = vmatprep.subr.mxu0 0.0
    %97 = vmatpush1.msra.mxu0 %v56
    %98 = vmatprep.subr.mxu0 0.0
    %99 = vmatpush1.msra.mxu0 %v55
    %100 = vmatprep.subr.mxu0 0.0
    %101 = vmatpush2.msra.mxu0 0.0
    %102 = vmatprep.subr.mxu0 0.0
    %103 = vmatpush2.msra.mxu0 0.0
    %104 = vmatprep.subr.mxu0 0.0
    %105 = vmatpush2.msra.mxu0 0.0
    %106 = vmatprep.subr.mxu0 0.0
    %107 = vmatpush2.msra.mxu0 0.0
    %108 = vmatprep.subr.mxu0 0.0
    %109 = vmatpush2.msra.mxu0 0.0
    %110 = vmatprep.subr.mxu0 0.0
    %111 = vmatpush2.msra.mxu0 0.0
    %112 = vmatprep.subr.mxu0 0.0
    %113 = vmatpush2.msra.mxu0 0.0
    %114 = vmatprep.subr.mxu0 0.0
    %115 = vmatpush2.msra.mxu0 0.0
    %116 = vmatprep.subr.mxu0 0.0
    %117 = vmatpush2.msra.mxu0 0.0
    %118 = vmatprep.subr.mxu0 0.0
    %119 = vmatpush2.msra.mxu0 0.0
    %120 = vmatprep.subr.mxu0 0.0
    %121 = vmatpush2.msra.mxu0 0.0
    %122 = vmatprep.subr.mxu0 0.0
    %123 = vmatpush2.msra.mxu0 0.0
    %124 = vmatprep.subr.mxu0 0.0
    %125 = vmatpush2.msra.mxu0 0.0
    %126 = vmatprep.subr.mxu0 0.0
    %127 = vmatpush2.msra.mxu0 0.0
    %128 = vmatprep.subr.mxu0 0.0
    %129 = vmatpush2.msra.mxu0 0.0
    %130 = vmatprep.subr.mxu0 0.0
    %131 = vmatpush2.msra.mxu0 0.0
    %132 = vmatprep.mubr.f32.mxu0 0.0
    %133 = vmatmul.mubr.f32.gmra.mxu0 %v66
    %v134 = vpop.f32.mrf.mxu0
    %v135 = vadd.f32 0.0, %v134
    %v136 = vpop.f32.mrf.mxu0
    %137 = vdwg.mxu0
    %v139 = vrot.slane %v135, 1
    %v142 = vadd.f32 %v62, %v135
    %v143 = vadd.f32 %v63, %v139
    %v144 = vxor.u32 %v142, 2147483648
    %v145 = vxor.u32 %v143, 2147483648
    %v146 = vmul.f32 %v144, 1.442695
    %v147 = vpow.pop %v146
    %v148 = vmul.f32 %v145, 1.442695
    %v149 = vpow.pop %v148
    %v150 = vadd.f32 %v147, 1.0
    %v151 = vadd.f32 %v149, 1.0
    %v152 = vrcp.pop %v150
    %v153 = vmul.f32 1.0, %v152
    %v154 = vrcp.pop %v151
    %v155 = vmul.f32 1.0, %v154
    %v156 = vtanh.pop %v142
    %v157 = vtanh.pop %v143
    %v159 = vrot.slane %v60, 1
    %160 = vrot.lane.b32.xlu0 %v60, 32
    %v161 = vpop.permute.xlu0 %160
    %162 = vrot.lane.b32.xlu0 %v159, 32
    %v163 = vpop.permute.xlu0 %162
    %v166 = vmul.f32 %v153, %v161
    %v167 = vmul.f32 %v155, %v163
    %170 = vrot.lane.b32.xlu0 %v156, 64
    %v171 = vpop.permute.xlu0 %170
    %172 = vrot.lane.b32.xlu0 %v157, 64
    %v173 = vpop.permute.xlu0 %172
    %v176 = vmul.f32 %v153, %v171
    %v177 = vmul.f32 %v155, %v173
    %180 = vrot.lane.b32.xlu0 %v176, 32
    %v181 = vpop.permute.xlu0 %180
    %182 = vrot.lane.b32.xlu0 %v177, 32
    %v183 = vpop.permute.xlu0 %182
    %v186 = vadd.f32 %v166, %v181
    %v187 = vadd.f32 %v167, %v183
    %v188 = vtanh.pop %v186
    %v189 = vtanh.pop %v187
    %192 = vrot.lane.b32.xlu0 %v188, 64
    %v193 = vpop.permute.xlu0 %192
    %194 = vrot.lane.b32.xlu0 %v189, 64
    %v195 = vpop.permute.xlu0 %194
    %v198 = vmul.f32 %v153, %v193
    %v199 = vmul.f32 %v155, %v195
    %v200 = vstv %s61
    %vm201 = vcmp.lt.s32.totalorder %v200, %v54
    %v202 = vsel %vm201, 1, 0
    %203 = vset.pattern.permute.xlu0 0
    %204 = vperm.xlu0 %203, %v202
    %v205 = vpop.permute.xlu0 %204
    %vm206 = vcmp.eq.s32.totalorder %v205, 1
    %v209 = vrot.slane %v199, 7
    %vm210 = vcmask 1041409
    %v211 = vsel %vm210, %v209, %v198
    %212 = vrot.lane.b32.xlu0 %v211, 32
    %v213 = vpop.permute.xlu0 %212
    %v215 = vsel %vm206, %v213, %v59
    %v218 = vrot.slane %v187, 7
    %v219 = vsel %vm210, %v218, %v186
    %220 = vrot.lane.b32.xlu0 %v219, 96
    %v221 = vpop.permute.xlu0 %220
    %v223 = vsel %vm206, %v221, %v60
    %v224 = vsel %vm206, %v213, 0.0
    %v227 = vunpack.c.l.s4 1966171168
    %v228 = vunpack.c.0.s8 %v227
    %v229 = vlaneseq
    %v230 = vshrl.u32 %v229, 7
    %v231 = vsub.s32 %v228, %v230
    %v232 = vrot.slane %v224, %v231
    %v233 = vcombine.high %v232, %v232
    %v235 = vunpack.c.l.s4 1966171168
    %v236 = vunpack.c.0.s8 %v235
    %v237 = vlaneseq
    %v238 = vshrl.u32 %v237, 7
    %v239 = vsub.s32 %v236, %v238
    %v240 = vrot.slane %v232, %v239
    %v242 = vunpack.c.l.s4 1966171168
    %v243 = vunpack.c.0.s8 %v242
    %v244 = vlaneseq
    %v245 = vshrl.u32 %v244, 7
    %v246 = vsub.s32 %v243, %v245
    %v247 = vrot.slane %v233, %v246
    %vm250 = vcmask 253952
    %251 = vst.msk [vmem:[#allocation9] sm:$0x1] %vm250, %v240
    %252 = vst.msk [vmem:[#allocation9 + $0x8] sm:$0x1] %vm250, %v247
    %s253 = sadd.s32 %s61, 1
    %v254 = vld [vmem:[#allocation4 + $0x1] sm:$0x1]
    %v255 = vld [vmem:[#allocation4 + $0x9] sm:$0x1]
    %v257 = vsel %vm64, %v215, 0
    %259 = vmatprep.subr.mxu0 0.0
    %260 = vmatpush1.msra.mxu0 0.0
    %261 = vmatprep.subr.mxu0 0.0
    %262 = vmatpush1.msra.mxu0 0.0
    %263 = vmatprep.subr.mxu0 0.0
    %264 = vmatpush1.msra.mxu0 0.0
    %265 = vmatprep.subr.mxu0 0.0
    %266 = vmatpush1.msra.mxu0 0.0
    %267 = vmatprep.subr.mxu0 0.0
    %268 = vmatpush1.msra.mxu0 0.0
    %269 = vmatprep.subr.mxu0 0.0
    %270 = vmatpush1.msra.mxu0 0.0
    %271 = vmatprep.subr.mxu0 0.0
    %272 = vmatpush1.msra.mxu0 0.0
    %273 = vmatprep.subr.mxu0 0.0
    %274 = vmatpush1.msra.mxu0 0.0
    %275 = vmatprep.subr.mxu0 0.0
    %276 = vmatpush1.msra.mxu0 0.0
    %277 = vmatprep.subr.mxu0 0.0
    %278 = vmatpush1.msra.mxu0 0.0
    %279 = vmatprep.subr.mxu0 0.0
    %280 = vmatpush1.msra.mxu0 0.0
    %281 = vmatprep.subr.mxu0 0.0
    %282 = vmatpush1.msra.mxu0 0.0
    %283 = vmatprep.subr.mxu0 0.0
    %284 = vmatpush1.msra.mxu0 %v58
    %285 = vmatprep.subr.mxu0 0.0
    %286 = vmatpush1.msra.mxu0 %v57
    %287 = vmatprep.subr.mxu0 0.0
    %288 = vmatpush1.msra.mxu0 %v56
    %289 = vmatprep.subr.mxu0 0.0
    %290 = vmatpush1.msra.mxu0 %v55
    %291 = vmatprep.subr.mxu0 0.0
    %292 = vmatpush2.msra.mxu0 0.0
    %293 = vmatprep.subr.mxu0 0.0
    %294 = vmatpush2.msra.mxu0 0.0
    %295 = vmatprep.subr.mxu0 0.0
    %296 = vmatpush2.msra.mxu0 0.0
    %297 = vmatprep.subr.mxu0 0.0
    %298 = vmatpush2.msra.mxu0 0.0
    %299 = vmatprep.subr.mxu0 0.0
    %300 = vmatpush2.msra.mxu0 0.0
    %301 = vmatprep.subr.mxu0 0.0
    %302 = vmatpush2.msra.mxu0 0.0
    %303 = vmatprep.subr.mxu0 0.0
    %304 = vmatpush2.msra.mxu0 0.0
    %305 = vmatprep.subr.mxu0 0.0
    %306 = vmatpush2.msra.mxu0 0.0
    %307 = vmatprep.subr.mxu0 0.0
    %308 = vmatpush2.msra.mxu0 0.0
    %309 = vmatprep.subr.mxu0 0.0
    %310 = vmatpush2.msra.mxu0 0.0
    %311 = vmatprep.subr.mxu0 0.0
    %312 = vmatpush2.msra.mxu0 0.0
    %313 = vmatprep.subr.mxu0 0.0
    %314 = vmatpush2.msra.mxu0 0.0
    %315 = vmatprep.subr.mxu0 0.0
    %316 = vmatpush2.msra.mxu0 0.0
    %317 = vmatprep.subr.mxu0 0.0
    %318 = vmatpush2.msra.mxu0 0.0
    %319 = vmatprep.subr.mxu0 0.0
    %320 = vmatpush2.msra.mxu0 0.0
    %321 = vmatprep.subr.mxu0 0.0
    %322 = vmatpush2.msra.mxu0 0.0
    %323 = vmatprep.mubr.f32.mxu0 0.0
    %324 = vmatmul.mubr.f32.gmra.mxu0 %v257
    %v325 = vpop.f32.mrf.mxu0
    %v326 = vadd.f32 0.0, %v325
    %v327 = vpop.f32.mrf.mxu0
    %328 = vdwg.mxu0
    %v330 = vrot.slane %v326, 1
    %v333 = vadd.f32 %v254, %v326
    %v334 = vadd.f32 %v255, %v330
    %v335 = vxor.u32 %v333, 2147483648
    %v336 = vxor.u32 %v334, 2147483648
    %v337 = vmul.f32 %v335, 1.442695
    %v338 = vpow.pop %v337
    %v339 = vmul.f32 %v336, 1.442695
    %v340 = vpow.pop %v339
    %v341 = vadd.f32 %v338, 1.0
    %v342 = vadd.f32 %v340, 1.0
    %v343 = vrcp.pop %v341
    %v344 = vmul.f32 1.0, %v343
    %v345 = vrcp.pop %v342
    %v346 = vmul.f32 1.0, %v345
    %v347 = vtanh.pop %v333
    %v348 = vtanh.pop %v334
    %v350 = vrot.slane %v223, 1
    %351 = vrot.lane.b32.xlu0 %v223, 32
    %v352 = vpop.permute.xlu0 %351
    %353 = vrot.lane.b32.xlu0 %v350, 32
    %v354 = vpop.permute.xlu0 %353
    %v357 = vmul.f32 %v344, %v352
    %v358 = vmul.f32 %v346, %v354
    %361 = vrot.lane.b32.xlu0 %v347, 64
    %v362 = vpop.permute.xlu0 %361
    %363 = vrot.lane.b32.xlu0 %v348, 64
    %v364 = vpop.permute.xlu0 %363
    %v367 = vmul.f32 %v344, %v362
    %v368 = vmul.f32 %v346, %v364
    %371 = vrot.lane.b32.xlu0 %v367, 32
    %v372 = vpop.permute.xlu0 %371
    %373 = vrot.lane.b32.xlu0 %v368, 32
    %v374 = vpop.permute.xlu0 %373
    %v377 = vadd.f32 %v357, %v372
    %v378 = vadd.f32 %v358, %v374
    %v379 = vtanh.pop %v377
    %v380 = vtanh.pop %v378
    %383 = vrot.lane.b32.xlu0 %v379, 64
    %v384 = vpop.permute.xlu0 %383
    %385 = vrot.lane.b32.xlu0 %v380, 64
    %v386 = vpop.permute.xlu0 %385
    %v389 = vmul.f32 %v344, %v384
    %v390 = vmul.f32 %v346, %v386
    %v391 = vstv %s253
    %vm392 = vcmp.lt.s32.totalorder %v391, %v54
    %v393 = vsel %vm392, 1, 0
    %394 = vset.pattern.permute.xlu0 0
    %395 = vperm.xlu0 %394, %v393
    %v396 = vpop.permute.xlu0 %395
    %vm397 = vcmp.eq.s32.totalorder %v396, 1
    %v400 = vrot.slane %v390, 7
    %v401 = vsel %vm210, %v400, %v389
    %402 = vrot.lane.b32.xlu0 %v401, 32
    %v403 = vpop.permute.xlu0 %402
    %v405 = vsel %vm397, %v403, %v215
    %v408 = vrot.slane %v378, 7
    %v409 = vsel %vm210, %v408, %v377
    %410 = vrot.lane.b32.xlu0 %v409, 96
    %v411 = vpop.permute.xlu0 %410
    %v413 = vsel %vm397, %v411, %v223
    %v414 = vsel %vm397, %v403, 0.0
    %v417 = vunpack.c.l.s4 1966171168
    %v418 = vunpack.c.0.s8 %v417
    %v419 = vlaneseq
    %v420 = vshrl.u32 %v419, 7
    %v421 = vsub.s32 %v418, %v420
    %v422 = vrot.slane %v414, %v421
    %v423 = vcombine.high %v422, %v422
    %v425 = vunpack.c.l.s4 1966171168
    %v426 = vunpack.c.0.s8 %v425
    %v427 = vlaneseq
    %v428 = vshrl.u32 %v427, 7
    %v429 = vsub.s32 %v426, %v428
    %v430 = vrot.slane %v422, %v429
    %v432 = vunpack.c.l.s4 1966171168
    %v433 = vunpack.c.0.s8 %v432
    %v434 = vlaneseq
    %v435 = vshrl.u32 %v434, 7
    %v436 = vsub.s32 %v433, %v435
    %v437 = vrot.slane %v423, %v436
    %440 = vst.msk [vmem:[#allocation9 + $0x1] sm:$0x1] %vm250, %v430
    %441 = vst.msk [vmem:[#allocation9 + $0x9] sm:$0x1] %vm250, %v437
    %s442 = sadd.s32 %s61, 2
    %v443 = vld [vmem:[#allocation4 + $0x2] sm:$0x1]
    %v444 = vld [vmem:[#allocation4 + $0xa] sm:$0x1]
    %v446 = vsel %vm64, %v405, 0
    %448 = vmatprep.subr.mxu0 0.0
    %449 = vmatpush1.msra.mxu0 0.0
    %450 = vmatprep.subr.mxu0 0.0
    %451 = vmatpush1.msra.mxu0 0.0
    %452 = vmatprep.subr.mxu0 0.0
    %453 = vmatpush1.msra.mxu0 0.0
    %454 = vmatprep.subr.mxu0 0.0
    %455 = vmatpush1.msra.mxu0 0.0
    %456 = vmatprep.subr.mxu0 0.0
    %457 = vmatpush1.msra.mxu0 0.0
    %458 = vmatprep.subr.mxu0 0.0
    %459 = vmatpush1.msra.mxu0 0.0
    %460 = vmatprep.subr.mxu0 0.0
    %461 = vmatpush1.msra.mxu0 0.0
    %462 = vmatprep.subr.mxu0 0.0
    %463 = vmatpush1.msra.mxu0 0.0
    %464 = vmatprep.subr.mxu0 0.0
    %465 = vmatpush1.msra.mxu0 0.0
    %466 = vmatprep.subr.mxu0 0.0
    %467 = vmatpush1.msra.mxu0 0.0
    %468 = vmatprep.subr.mxu0 0.0
    %469 = vmatpush1.msra.mxu0 0.0
    %470 = vmatprep.subr.mxu0 0.0
    %471 = vmatpush1.msra.mxu0 0.0
    %472 = vmatprep.subr.mxu0 0.0
    %473 = vmatpush1.msra.mxu0 %v58
    %474 = vmatprep.subr.mxu0 0.0
    %475 = vmatpush1.msra.mxu0 %v57
    %476 = vmatprep.subr.mxu0 0.0
    %477 = vmatpush1.msra.mxu0 %v56
    %478 = vmatprep.subr.mxu0 0.0
    %479 = vmatpush1.msra.mxu0 %v55
    %480 = vmatprep.subr.mxu0 0.0
    %481 = vmatpush2.msra.mxu0 0.0
    %482 = vmatprep.subr.mxu0 0.0
    %483 = vmatpush2.msra.mxu0 0.0
    %484 = vmatprep.subr.mxu0 0.0
    %485 = vmatpush2.msra.mxu0 0.0
    %486 = vmatprep.subr.mxu0 0.0
    %487 = vmatpush2.msra.mxu0 0.0
    %488 = vmatprep.subr.mxu0 0.0
    %489 = vmatpush2.msra.mxu0 0.0
    %490 = vmatprep.subr.mxu0 0.0
    %491 = vmatpush2.msra.mxu0 0.0
    %492 = vmatprep.subr.mxu0 0.0
    %493 = vmatpush2.msra.mxu0 0.0
    %494 = vmatprep.subr.mxu0 0.0
    %495 = vmatpush2.msra.mxu0 0.0
    %496 = vmatprep.subr.mxu0 0.0
    %497 = vmatpush2.msra.mxu0 0.0
    %498 = vmatprep.subr.mxu0 0.0
    %499 = vmatpush2.msra.mxu0 0.0
    %500 = vmatprep.subr.mxu0 0.0
    %501 = vmatpush2.msra.mxu0 0.0
    %502 = vmatprep.subr.mxu0 0.0
    %503 = vmatpush2.msra.mxu0 0.0
    %504 = vmatprep.subr.mxu0 0.0
    %505 = vmatpush2.msra.mxu0 0.0
    %506 = vmatprep.subr.mxu0 0.0
    %507 = vmatpush2.msra.mxu0 0.0
    %508 = vmatprep.subr.mxu0 0.0
    %509 = vmatpush2.msra.mxu0 0.0
    %510 = vmatprep.subr.mxu0 0.0
    %511 = vmatpush2.msra.mxu0 0.0
    %512 = vmatprep.mubr.f32.mxu0 0.0
    %513 = vmatmul.mubr.f32.gmra.mxu0 %v446
    %v514 = vpop.f32.mrf.mxu0
    %v515 = vadd.f32 0.0, %v514
    %v516 = vpop.f32.mrf.mxu0
    %517 = vdwg.mxu0
    %v519 = vrot.slane %v515, 1
    %v522 = vadd.f32 %v443, %v515
    %v523 = vadd.f32 %v444, %v519
    %v524 = vxor.u32 %v522, 2147483648
    %v525 = vxor.u32 %v523, 2147483648
    %v526 = vmul.f32 %v524, 1.442695
    %v527 = vpow.pop %v526
    %v528 = vmul.f32 %v525, 1.442695
    %v529 = vpow.pop %v528
    %v530 = vadd.f32 %v527, 1.0
    %v531 = vadd.f32 %v529, 1.0
    %v532 = vrcp.pop %v530
    %v533 = vmul.f32 1.0, %v532
    %v534 = vrcp.pop %v531
    %v535 = vmul.f32 1.0, %v534
    %v536 = vtanh.pop %v522
    %v537 = vtanh.pop %v523
    %v539 = vrot.slane %v413, 1
    %540 = vrot.lane.b32.xlu0 %v413, 32
    %v541 = vpop.permute.xlu0 %540
    %542 = vrot.lane.b32.xlu0 %v539, 32
    %v543 = vpop.permute.xlu0 %542
    %v546 = vmul.f32 %v533, %v541
    %v547 = vmul.f32 %v535, %v543
    %550 = vrot.lane.b32.xlu0 %v536, 64
    %v551 = vpop.permute.xlu0 %550
    %552 = vrot.lane.b32.xlu0 %v537, 64
    %v553 = vpop.permute.xlu0 %552
    %v556 = vmul.f32 %v533, %v551
    %v557 = vmul.f32 %v535, %v553
    %560 = vrot.lane.b32.xlu0 %v556, 32
    %v561 = vpop.permute.xlu0 %560
    %562 = vrot.lane.b32.xlu0 %v557, 32
    %v563 = vpop.permute.xlu0 %562
    %v566 = vadd.f32 %v546, %v561
    %v567 = vadd.f32 %v547, %v563
    %v568 = vtanh.pop %v566
    %v569 = vtanh.pop %v567
    %572 = vrot.lane.b32.xlu0 %v568, 64
    %v573 = vpop.permute.xlu0 %572
    %574 = vrot.lane.b32.xlu0 %v569, 64
    %v575 = vpop.permute.xlu0 %574
    %v578 = vmul.f32 %v533, %v573
    %v579 = vmul.f32 %v535, %v575
    %v580 = vstv %s442
    %vm581 = vcmp.lt.s32.totalorder %v580, %v54
    %v582 = vsel %vm581, 1, 0
    %583 = vset.pattern.permute.xlu0 0
    %584 = vperm.xlu0 %583, %v582
    %v585 = vpop.permute.xlu0 %584
    %vm586 = vcmp.eq.s32.totalorder %v585, 1
    %v589 = vrot.slane %v579, 7
    %v590 = vsel %vm210, %v589, %v578
    %591 = vrot.lane.b32.xlu0 %v590, 32
    %v592 = vpop.permute.xlu0 %591
    %v594 = vsel %vm586, %v592, %v405
    %v597 = vrot.slane %v567, 7
    %v598 = vsel %vm210, %v597, %v566
    %599 = vrot.lane.b32.xlu0 %v598, 96
    %v600 = vpop.permute.xlu0 %599
    %v602 = vsel %vm586, %v600, %v413
    %v603 = vsel %vm586, %v592, 0.0
    %v606 = vunpack.c.l.s4 1966171168
    %v607 = vunpack.c.0.s8 %v606
    %v608 = vlaneseq
    %v609 = vshrl.u32 %v608, 7
    %v610 = vsub.s32 %v607, %v609
    %v611 = vrot.slane %v603, %v610
    %v612 = vcombine.high %v611, %v611
    %v614 = vunpack.c.l.s4 1966171168
    %v615 = vunpack.c.0.s8 %v614
    %v616 = vlaneseq
    %v617 = vshrl.u32 %v616, 7
    %v618 = vsub.s32 %v615, %v617
    %v619 = vrot.slane %v611, %v618
    %v621 = vunpack.c.l.s4 1966171168
    %v622 = vunpack.c.0.s8 %v621
    %v623 = vlaneseq
    %v624 = vshrl.u32 %v623, 7
    %v625 = vsub.s32 %v622, %v624
    %v626 = vrot.slane %v612, %v625
    %629 = vst.msk [vmem:[#allocation9 + $0x2] sm:$0x1] %vm250, %v619
    %630 = vst.msk [vmem:[#allocation9 + $0xa] sm:$0x1] %vm250, %v626
    %s631 = sadd.s32 %s61, 3
    %v632 = vld [vmem:[#allocation4 + $0x3] sm:$0x1]
    %v633 = vld [vmem:[#allocation4 + $0xb] sm:$0x1]
    %v635 = vsel %vm64, %v594, 0
    %637 = vmatprep.subr.mxu0 0.0
    %638 = vmatpush1.msra.mxu0 0.0
    %639 = vmatprep.subr.mxu0 0.0
    %640 = vmatpush1.msra.mxu0 0.0
    %641 = vmatprep.subr.mxu0 0.0
    %642 = vmatpush1.msra.mxu0 0.0
    %643 = vmatprep.subr.mxu0 0.0
    %644 = vmatpush1.msra.mxu0 0.0
    %645 = vmatprep.subr.mxu0 0.0
    %646 = vmatpush1.msra.mxu0 0.0
    %647 = vmatprep.subr.mxu0 0.0
    %648 = vmatpush1.msra.mxu0 0.0
    %649 = vmatprep.subr.mxu0 0.0
    %650 = vmatpush1.msra.mxu0 0.0
    %651 = vmatprep.subr.mxu0 0.0
    %652 = vmatpush1.msra.mxu0 0.0
    %653 = vmatprep.subr.mxu0 0.0
    %654 = vmatpush1.msra.mxu0 0.0
    %655 = vmatprep.subr.mxu0 0.0
    %656 = vmatpush1.msra.mxu0 0.0
    %657 = vmatprep.subr.mxu0 0.0
    %658 = vmatpush1.msra.mxu0 0.0
    %659 = vmatprep.subr.mxu0 0.0
    %660 = vmatpush1.msra.mxu0 0.0
    %661 = vmatprep.subr.mxu0 0.0
    %662 = vmatpush1.msra.mxu0 %v58
    %663 = vmatprep.subr.mxu0 0.0
    %664 = vmatpush1.msra.mxu0 %v57
    %665 = vmatprep.subr.mxu0 0.0
    %666 = vmatpush1.msra.mxu0 %v56
    %667 = vmatprep.subr.mxu0 0.0
    %668 = vmatpush1.msra.mxu0 %v55
    %669 = vmatprep.subr.mxu0 0.0
    %670 = vmatpush2.msra.mxu0 0.0
    %671 = vmatprep.subr.mxu0 0.0
    %672 = vmatpush2.msra.mxu0 0.0
    %673 = vmatprep.subr.mxu0 0.0
    %674 = vmatpush2.msra.mxu0 0.0
    %675 = vmatprep.subr.mxu0 0.0
    %676 = vmatpush2.msra.mxu0 0.0
    %677 = vmatprep.subr.mxu0 0.0
    %678 = vmatpush2.msra.mxu0 0.0
    %679 = vmatprep.subr.mxu0 0.0
    %680 = vmatpush2.msra.mxu0 0.0
    %681 = vmatprep.subr.mxu0 0.0
    %682 = vmatpush2.msra.mxu0 0.0
    %683 = vmatprep.subr.mxu0 0.0
    %684 = vmatpush2.msra.mxu0 0.0
    %685 = vmatprep.subr.mxu0 0.0
    %686 = vmatpush2.msra.mxu0 0.0
    %687 = vmatprep.subr.mxu0 0.0
    %688 = vmatpush2.msra.mxu0 0.0
    %689 = vmatprep.subr.mxu0 0.0
    %690 = vmatpush2.msra.mxu0 0.0
    %691 = vmatprep.subr.mxu0 0.0
    %692 = vmatpush2.msra.mxu0 0.0
    %693 = vmatprep.subr.mxu0 0.0
    %694 = vmatpush2.msra.mxu0 0.0
    %695 = vmatprep.subr.mxu0 0.0
    %696 = vmatpush2.msra.mxu0 0.0
    %697 = vmatprep.subr.mxu0 0.0
    %698 = vmatpush2.msra.mxu0 0.0
    %699 = vmatprep.subr.mxu0 0.0
    %700 = vmatpush2.msra.mxu0 0.0
    %701 = vmatprep.mubr.f32.mxu0 0.0
    %702 = vmatmul.mubr.f32.gmra.mxu0 %v635
    %v703 = vpop.f32.mrf.mxu0
    %v704 = vadd.f32 0.0, %v703
    %v705 = vpop.f32.mrf.mxu0
    %706 = vdwg.mxu0
    %v708 = vrot.slane %v704, 1
    %v711 = vadd.f32 %v632, %v704
    %v712 = vadd.f32 %v633, %v708
    %v713 = vxor.u32 %v711, 2147483648
    %v714 = vxor.u32 %v712, 2147483648
    %v715 = vmul.f32 %v713, 1.442695
    %v716 = vpow.pop %v715
    %v717 = vmul.f32 %v714, 1.442695
    %v718 = vpow.pop %v717
    %v719 = vadd.f32 %v716, 1.0
    %v720 = vadd.f32 %v718, 1.0
    %v721 = vrcp.pop %v719
    %v722 = vmul.f32 1.0, %v721
    %v723 = vrcp.pop %v720
    %v724 = vmul.f32 1.0, %v723
    %v725 = vtanh.pop %v711
    %v726 = vtanh.pop %v712
    %v728 = vrot.slane %v602, 1
    %729 = vrot.lane.b32.xlu0 %v602, 32
    %v730 = vpop.permute.xlu0 %729
    %731 = vrot.lane.b32.xlu0 %v728, 32
    %v732 = vpop.permute.xlu0 %731
    %v735 = vmul.f32 %v722, %v730
    %v736 = vmul.f32 %v724, %v732
    %739 = vrot.lane.b32.xlu0 %v725, 64
    %v740 = vpop.permute.xlu0 %739
    %741 = vrot.lane.b32.xlu0 %v726, 64
    %v742 = vpop.permute.xlu0 %741
    %v745 = vmul.f32 %v722, %v740
    %v746 = vmul.f32 %v724, %v742
    %749 = vrot.lane.b32.xlu0 %v745, 32
    %v750 = vpop.permute.xlu0 %749
    %751 = vrot.lane.b32.xlu0 %v746, 32
    %v752 = vpop.permute.xlu0 %751
    %v755 = vadd.f32 %v735, %v750
    %v756 = vadd.f32 %v736, %v752
    %v757 = vtanh.pop %v755
    %v758 = vtanh.pop %v756
    %761 = vrot.lane.b32.xlu0 %v757, 64
    %v762 = vpop.permute.xlu0 %761
    %763 = vrot.lane.b32.xlu0 %v758, 64
    %v764 = vpop.permute.xlu0 %763
    %v767 = vmul.f32 %v722, %v762
    %v768 = vmul.f32 %v724, %v764
    %v769 = vstv %s631
    %vm770 = vcmp.lt.s32.totalorder %v769, %v54
    %v771 = vsel %vm770, 1, 0
    %772 = vset.pattern.permute.xlu0 0
    %773 = vperm.xlu0 %772, %v771
    %v774 = vpop.permute.xlu0 %773
    %vm775 = vcmp.eq.s32.totalorder %v774, 1
    %v778 = vrot.slane %v768, 7
    %v779 = vsel %vm210, %v778, %v767
    %780 = vrot.lane.b32.xlu0 %v779, 32
    %v781 = vpop.permute.xlu0 %780
    %v783 = vsel %vm775, %v781, %v594
    %v786 = vrot.slane %v756, 7
    %v787 = vsel %vm210, %v786, %v755
    %788 = vrot.lane.b32.xlu0 %v787, 96
    %v789 = vpop.permute.xlu0 %788
    %v791 = vsel %vm775, %v789, %v602
    %v792 = vsel %vm775, %v781, 0.0
    %v795 = vunpack.c.l.s4 1966171168
    %v796 = vunpack.c.0.s8 %v795
    %v797 = vlaneseq
    %v798 = vshrl.u32 %v797, 7
    %v799 = vsub.s32 %v796, %v798
    %v800 = vrot.slane %v792, %v799
    %v801 = vcombine.high %v800, %v800
    %v803 = vunpack.c.l.s4 1966171168
    %v804 = vunpack.c.0.s8 %v803
    %v805 = vlaneseq
    %v806 = vshrl.u32 %v805, 7
    %v807 = vsub.s32 %v804, %v806
    %v808 = vrot.slane %v800, %v807
    %v810 = vunpack.c.l.s4 1966171168
    %v811 = vunpack.c.0.s8 %v810
    %v812 = vlaneseq
    %v813 = vshrl.u32 %v812, 7
    %v814 = vsub.s32 %v811, %v813
    %v815 = vrot.slane %v801, %v814
    %818 = vst.msk [vmem:[#allocation9 + $0x3] sm:$0x1] %vm250, %v808
    %819 = vst.msk [vmem:[#allocation9 + $0xb] sm:$0x1] %vm250, %v815
    %s820 = sadd.s32 %s61, 4
    %v821 = vld [vmem:[#allocation4 + $0x4] sm:$0x1]
    %v822 = vld [vmem:[#allocation4 + $0xc] sm:$0x1]
    %v824 = vsel %vm64, %v783, 0
    %826 = vmatprep.subr.mxu0 0.0
    %827 = vmatpush1.msra.mxu0 0.0
    %828 = vmatprep.subr.mxu0 0.0
    %829 = vmatpush1.msra.mxu0 0.0
    %830 = vmatprep.subr.mxu0 0.0
    %831 = vmatpush1.msra.mxu0 0.0
    %832 = vmatprep.subr.mxu0 0.0
    %833 = vmatpush1.msra.mxu0 0.0
    %834 = vmatprep.subr.mxu0 0.0
    %835 = vmatpush1.msra.mxu0 0.0
    %836 = vmatprep.subr.mxu0 0.0
    %837 = vmatpush1.msra.mxu0 0.0
    %838 = vmatprep.subr.mxu0 0.0
    %839 = vmatpush1.msra.mxu0 0.0
    %840 = vmatprep.subr.mxu0 0.0
    %841 = vmatpush1.msra.mxu0 0.0
    %842 = vmatprep.subr.mxu0 0.0
    %843 = vmatpush1.msra.mxu0 0.0
    %844 = vmatprep.subr.mxu0 0.0
    %845 = vmatpush1.msra.mxu0 0.0
    %846 = vmatprep.subr.mxu0 0.0
    %847 = vmatpush1.msra.mxu0 0.0
    %848 = vmatprep.subr.mxu0 0.0
    %849 = vmatpush1.msra.mxu0 0.0
    %850 = vmatprep.subr.mxu0 0.0
    %851 = vmatpush1.msra.mxu0 %v58
    %852 = vmatprep.subr.mxu0 0.0
    %853 = vmatpush1.msra.mxu0 %v57
    %854 = vmatprep.subr.mxu0 0.0
    %855 = vmatpush1.msra.mxu0 %v56
    %856 = vmatprep.subr.mxu0 0.0
    %857 = vmatpush1.msra.mxu0 %v55
    %858 = vmatprep.subr.mxu0 0.0
    %859 = vmatpush2.msra.mxu0 0.0
    %860 = vmatprep.subr.mxu0 0.0
    %861 = vmatpush2.msra.mxu0 0.0
    %862 = vmatprep.subr.mxu0 0.0
    %863 = vmatpush2.msra.mxu0 0.0
    %864 = vmatprep.subr.mxu0 0.0
    %865 = vmatpush2.msra.mxu0 0.0
    %866 = vmatprep.subr.mxu0 0.0
    %867 = vmatpush2.msra.mxu0 0.0
    %868 = vmatprep.subr.mxu0 0.0
    %869 = vmatpush2.msra.mxu0 0.0
    %870 = vmatprep.subr.mxu0 0.0
    %871 = vmatpush2.msra.mxu0 0.0
    %872 = vmatprep.subr.mxu0 0.0
    %873 = vmatpush2.msra.mxu0 0.0
    %874 = vmatprep.subr.mxu0 0.0
    %875 = vmatpush2.msra.mxu0 0.0
    %876 = vmatprep.subr.mxu0 0.0
    %877 = vmatpush2.msra.mxu0 0.0
    %878 = vmatprep.subr.mxu0 0.0
    %879 = vmatpush2.msra.mxu0 0.0
    %880 = vmatprep.subr.mxu0 0.0
    %881 = vmatpush2.msra.mxu0 0.0
    %882 = vmatprep.subr.mxu0 0.0
    %883 = vmatpush2.msra.mxu0 0.0
    %884 = vmatprep.subr.mxu0 0.0
    %885 = vmatpush2.msra.mxu0 0.0
    %886 = vmatprep.subr.mxu0 0.0
    %887 = vmatpush2.msra.mxu0 0.0
    %888 = vmatprep.subr.mxu0 0.0
    %889 = vmatpush2.msra.mxu0 0.0
    %890 = vmatprep.mubr.f32.mxu0 0.0
    %891 = vmatmul.mubr.f32.gmra.mxu0 %v824
    %v892 = vpop.f32.mrf.mxu0
    %v893 = vadd.f32 0.0, %v892
    %v894 = vpop.f32.mrf.mxu0
    %895 = vdwg.mxu0
    %v897 = vrot.slane %v893, 1
    %v900 = vadd.f32 %v821, %v893
    %v901 = vadd.f32 %v822, %v897
    %v902 = vxor.u32 %v900, 2147483648
    %v903 = vxor.u32 %v901, 2147483648
    %v904 = vmul.f32 %v902, 1.442695
    %v905 = vpow.pop %v904
    %v906 = vmul.f32 %v903, 1.442695
    %v907 = vpow.pop %v906
    %v908 = vadd.f32 %v905, 1.0
    %v909 = vadd.f32 %v907, 1.0
    %v910 = vrcp.pop %v908
    %v911 = vmul.f32 1.0, %v910
    %v912 = vrcp.pop %v909
    %v913 = vmul.f32 1.0, %v912
    %v914 = vtanh.pop %v900
    %v915 = vtanh.pop %v901
    %v917 = vrot.slane %v791, 1
    %918 = vrot.lane.b32.xlu0 %v791, 32
    %v919 = vpop.permute.xlu0 %918
    %920 = vrot.lane.b32.xlu0 %v917, 32
    %v921 = vpop.permute.xlu0 %920
    %v924 = vmul.f32 %v911, %v919
    %v925 = vmul.f32 %v913, %v921
    %928 = vrot.lane.b32.xlu0 %v914, 64
    %v929 = vpop.permute.xlu0 %928
    %930 = vrot.lane.b32.xlu0 %v915, 64
    %v931 = vpop.permute.xlu0 %930
    %v934 = vmul.f32 %v911, %v929
    %v935 = vmul.f32 %v913, %v931
    %938 = vrot.lane.b32.xlu0 %v934, 32
    %v939 = vpop.permute.xlu0 %938
    %940 = vrot.lane.b32.xlu0 %v935, 32
    %v941 = vpop.permute.xlu0 %940
    %v944 = vadd.f32 %v924, %v939
    %v945 = vadd.f32 %v925, %v941
    %v946 = vtanh.pop %v944
    %v947 = vtanh.pop %v945
    %950 = vrot.lane.b32.xlu0 %v946, 64
    %v951 = vpop.permute.xlu0 %950
    %952 = vrot.lane.b32.xlu0 %v947, 64
    %v953 = vpop.permute.xlu0 %952
    %v956 = vmul.f32 %v911, %v951
    %v957 = vmul.f32 %v913, %v953
    %v958 = vstv %s820
    %vm959 = vcmp.lt.s32.totalorder %v958, %v54
    %v960 = vsel %vm959, 1, 0
    %961 = vset.pattern.permute.xlu0 0
    %962 = vperm.xlu0 %961, %v960
    %v963 = vpop.permute.xlu0 %962
    %vm964 = vcmp.eq.s32.totalorder %v963, 1
    %v967 = vrot.slane %v957, 7
    %v968 = vsel %vm210, %v967, %v956
    %969 = vrot.lane.b32.xlu0 %v968, 32
    %v970 = vpop.permute.xlu0 %969
    %v972 = vsel %vm964, %v970, %v783
    %v975 = vrot.slane %v945, 7
    %v976 = vsel %vm210, %v975, %v944
    %977 = vrot.lane.b32.xlu0 %v976, 96
    %v978 = vpop.permute.xlu0 %977
    %v980 = vsel %vm964, %v978, %v791
    %v981 = vsel %vm964, %v970, 0.0
    %v984 = vunpack.c.l.s4 1966171168
    %v985 = vunpack.c.0.s8 %v984
    %v986 = vlaneseq
    %v987 = vshrl.u32 %v986, 7
    %v988 = vsub.s32 %v985, %v987
    %v989 = vrot.slane %v981, %v988
    %v990 = vcombine.high %v989, %v989
    %v992 = vunpack.c.l.s4 1966171168
    %v993 = vunpack.c.0.s8 %v992
    %v994 = vlaneseq
    %v995 = vshrl.u32 %v994, 7
    %v996 = vsub.s32 %v993, %v995
    %v997 = vrot.slane %v989, %v996
    %v999 = vunpack.c.l.s4 1966171168
    %v1000 = vunpack.c.0.s8 %v999
    %v1001 = vlaneseq
    %v1002 = vshrl.u32 %v1001, 7
    %v1003 = vsub.s32 %v1000, %v1002
    %v1004 = vrot.slane %v990, %v1003
    %1007 = vst.msk [vmem:[#allocation9 + $0x4] sm:$0x1] %vm250, %v997
    %1008 = vst.msk [vmem:[#allocation9 + $0xc] sm:$0x1] %vm250, %v1004
    %s1009 = sadd.s32 %s61, 5
    %v1010 = vld [vmem:[#allocation4 + $0x5] sm:$0x1]
    %v1011 = vld [vmem:[#allocation4 + $0xd] sm:$0x1]
    %v1013 = vsel %vm64, %v972, 0
    %1015 = vmatprep.subr.mxu0 0.0
    %1016 = vmatpush1.msra.mxu0 0.0
    %1017 = vmatprep.subr.mxu0 0.0
    %1018 = vmatpush1.msra.mxu0 0.0
    %1019 = vmatprep.subr.mxu0 0.0
    %1020 = vmatpush1.msra.mxu0 0.0
    %1021 = vmatprep.subr.mxu0 0.0
    %1022 = vmatpush1.msra.mxu0 0.0
    %1023 = vmatprep.subr.mxu0 0.0
    %1024 = vmatpush1.msra.mxu0 0.0
    %1025 = vmatprep.subr.mxu0 0.0
    %1026 = vmatpush1.msra.mxu0 0.0
    %1027 = vmatprep.subr.mxu0 0.0
    %1028 = vmatpush1.msra.mxu0 0.0
    %1029 = vmatprep.subr.mxu0 0.0
    %1030 = vmatpush1.msra.mxu0 0.0
    %1031 = vmatprep.subr.mxu0 0.0
    %1032 = vmatpush1.msra.mxu0 0.0
    %1033 = vmatprep.subr.mxu0 0.0
    %1034 = vmatpush1.msra.mxu0 0.0
    %1035 = vmatprep.subr.mxu0 0.0
    %1036 = vmatpush1.msra.mxu0 0.0
    %1037 = vmatprep.subr.mxu0 0.0
    %1038 = vmatpush1.msra.mxu0 0.0
    %1039 = vmatprep.subr.mxu0 0.0
    %1040 = vmatpush1.msra.mxu0 %v58
    %1041 = vmatprep.subr.mxu0 0.0
    %1042 = vmatpush1.msra.mxu0 %v57
    %1043 = vmatprep.subr.mxu0 0.0
    %1044 = vmatpush1.msra.mxu0 %v56
    %1045 = vmatprep.subr.mxu0 0.0
    %1046 = vmatpush1.msra.mxu0 %v55
    %1047 = vmatprep.subr.mxu0 0.0
    %1048 = vmatpush2.msra.mxu0 0.0
    %1049 = vmatprep.subr.mxu0 0.0
    %1050 = vmatpush2.msra.mxu0 0.0
    %1051 = vmatprep.subr.mxu0 0.0
    %1052 = vmatpush2.msra.mxu0 0.0
    %1053 = vmatprep.subr.mxu0 0.0
    %1054 = vmatpush2.msra.mxu0 0.0
    %1055 = vmatprep.subr.mxu0 0.0
    %1056 = vmatpush2.msra.mxu0 0.0
    %1057 = vmatprep.subr.mxu0 0.0
    %1058 = vmatpush2.msra.mxu0 0.0
    %1059 = vmatprep.subr.mxu0 0.0
    %1060 = vmatpush2.msra.mxu0 0.0
    %1061 = vmatprep.subr.mxu0 0.0
    %1062 = vmatpush2.msra.mxu0 0.0
    %1063 = vmatprep.subr.mxu0 0.0
    %1064 = vmatpush2.msra.mxu0 0.0
    %1065 = vmatprep.subr.mxu0 0.0
    %1066 = vmatpush2.msra.mxu0 0.0
    %1067 = vmatprep.subr.mxu0 0.0
    %1068 = vmatpush2.msra.mxu0 0.0
    %1069 = vmatprep.subr.mxu0 0.0
    %1070 = vmatpush2.msra.mxu0 0.0
    %1071 = vmatprep.subr.mxu0 0.0
    %1072 = vmatpush2.msra.mxu0 0.0
    %1073 = vmatprep.subr.mxu0 0.0
    %1074 = vmatpush2.msra.mxu0 0.0
    %1075 = vmatprep.subr.mxu0 0.0
    %1076 = vmatpush2.msra.mxu0 0.0
    %1077 = vmatprep.subr.mxu0 0.0
    %1078 = vmatpush2.msra.mxu0 0.0
    %1079 = vmatprep.mubr.f32.mxu0 0.0
    %1080 = vmatmul.mubr.f32.gmra.mxu0 %v1013
    %v1081 = vpop.f32.mrf.mxu0
    %v1082 = vadd.f32 0.0, %v1081
    %v1083 = vpop.f32.mrf.mxu0
    %1084 = vdwg.mxu0
    %v1086 = vrot.slane %v1082, 1
    %v1089 = vadd.f32 %v1010, %v1082
    %v1090 = vadd.f32 %v1011, %v1086
    %v1091 = vxor.u32 %v1089, 2147483648
    %v1092 = vxor.u32 %v1090, 2147483648
    %v1093 = vmul.f32 %v1091, 1.442695
    %v1094 = vpow.pop %v1093
    %v1095 = vmul.f32 %v1092, 1.442695
    %v1096 = vpow.pop %v1095
    %v1097 = vadd.f32 %v1094, 1.0
    %v1098 = vadd.f32 %v1096, 1.0
    %v1099 = vrcp.pop %v1097
    %v1100 = vmul.f32 1.0, %v1099
    %v1101 = vrcp.pop %v1098
    %v1102 = vmul.f32 1.0, %v1101
    %v1103 = vtanh.pop %v1089
    %v1104 = vtanh.pop %v1090
    %v1106 = vrot.slane %v980, 1
    %1107 = vrot.lane.b32.xlu0 %v980, 32
    %v1108 = vpop.permute.xlu0 %1107
    %1109 = vrot.lane.b32.xlu0 %v1106, 32
    %v1110 = vpop.permute.xlu0 %1109
    %v1113 = vmul.f32 %v1100, %v1108
    %v1114 = vmul.f32 %v1102, %v1110
    %1117 = vrot.lane.b32.xlu0 %v1103, 64
    %v1118 = vpop.permute.xlu0 %1117
    %1119 = vrot.lane.b32.xlu0 %v1104, 64
    %v1120 = vpop.permute.xlu0 %1119
    %v1123 = vmul.f32 %v1100, %v1118
    %v1124 = vmul.f32 %v1102, %v1120
    %1127 = vrot.lane.b32.xlu0 %v1123, 32
    %v1128 = vpop.permute.xlu0 %1127
    %1129 = vrot.lane.b32.xlu0 %v1124, 32
    %v1130 = vpop.permute.xlu0 %1129
    %v1133 = vadd.f32 %v1113, %v1128
    %v1134 = vadd.f32 %v1114, %v1130
    %v1135 = vtanh.pop %v1133
    %v1136 = vtanh.pop %v1134
    %1139 = vrot.lane.b32.xlu0 %v1135, 64
    %v1140 = vpop.permute.xlu0 %1139
    %1141 = vrot.lane.b32.xlu0 %v1136, 64
    %v1142 = vpop.permute.xlu0 %1141
    %v1145 = vmul.f32 %v1100, %v1140
    %v1146 = vmul.f32 %v1102, %v1142
    %v1147 = vstv %s1009
    %vm1148 = vcmp.lt.s32.totalorder %v1147, %v54
    %v1149 = vsel %vm1148, 1, 0
    %1150 = vset.pattern.permute.xlu0 0
    %1151 = vperm.xlu0 %1150, %v1149
    %v1152 = vpop.permute.xlu0 %1151
    %vm1153 = vcmp.eq.s32.totalorder %v1152, 1
    %v1156 = vrot.slane %v1146, 7
    %v1157 = vsel %vm210, %v1156, %v1145
    %1158 = vrot.lane.b32.xlu0 %v1157, 32
    %v1159 = vpop.permute.xlu0 %1158
    %v1161 = vsel %vm1153, %v1159, %v972
    %v1164 = vrot.slane %v1134, 7
    %v1165 = vsel %vm210, %v1164, %v1133
    %1166 = vrot.lane.b32.xlu0 %v1165, 96
    %v1167 = vpop.permute.xlu0 %1166
    %v1169 = vsel %vm1153, %v1167, %v980
    %v1170 = vsel %vm1153, %v1159, 0.0
    %v1173 = vunpack.c.l.s4 1966171168
    %v1174 = vunpack.c.0.s8 %v1173
    %v1175 = vlaneseq
    %v1176 = vshrl.u32 %v1175, 7
    %v1177 = vsub.s32 %v1174, %v1176
    %v1178 = vrot.slane %v1170, %v1177
    %v1179 = vcombine.high %v1178, %v1178
    %v1181 = vunpack.c.l.s4 1966171168
    %v1182 = vunpack.c.0.s8 %v1181
    %v1183 = vlaneseq
    %v1184 = vshrl.u32 %v1183, 7
    %v1185 = vsub.s32 %v1182, %v1184
    %v1186 = vrot.slane %v1178, %v1185
    %v1188 = vunpack.c.l.s4 1966171168
    %v1189 = vunpack.c.0.s8 %v1188
    %v1190 = vlaneseq
    %v1191 = vshrl.u32 %v1190, 7
    %v1192 = vsub.s32 %v1189, %v1191
    %v1193 = vrot.slane %v1179, %v1192
    %1196 = vst.msk [vmem:[#allocation9 + $0x5] sm:$0x1] %vm250, %v1186
    %1197 = vst.msk [vmem:[#allocation9 + $0xd] sm:$0x1] %vm250, %v1193
    %s1198 = sadd.s32 %s61, 6
    %v1199 = vld [vmem:[#allocation4 + $0x6] sm:$0x1]
    %v1200 = vld [vmem:[#allocation4 + $0xe] sm:$0x1]
    %v1202 = vsel %vm64, %v1161, 0
    %1204 = vmatprep.subr.mxu0 0.0
    %1205 = vmatpush1.msra.mxu0 0.0
    %1206 = vmatprep.subr.mxu0 0.0
    %1207 = vmatpush1.msra.mxu0 0.0
    %1208 = vmatprep.subr.mxu0 0.0
    %1209 = vmatpush1.msra.mxu0 0.0
    %1210 = vmatprep.subr.mxu0 0.0
    %1211 = vmatpush1.msra.mxu0 0.0
    %1212 = vmatprep.subr.mxu0 0.0
    %1213 = vmatpush1.msra.mxu0 0.0
    %1214 = vmatprep.subr.mxu0 0.0
    %1215 = vmatpush1.msra.mxu0 0.0
    %1216 = vmatprep.subr.mxu0 0.0
    %1217 = vmatpush1.msra.mxu0 0.0
    %1218 = vmatprep.subr.mxu0 0.0
    %1219 = vmatpush1.msra.mxu0 0.0
    %1220 = vmatprep.subr.mxu0 0.0
    %1221 = vmatpush1.msra.mxu0 0.0
    %1222 = vmatprep.subr.mxu0 0.0
    %1223 = vmatpush1.msra.mxu0 0.0
    %1224 = vmatprep.subr.mxu0 0.0
    %1225 = vmatpush1.msra.mxu0 0.0
    %1226 = vmatprep.subr.mxu0 0.0
    %1227 = vmatpush1.msra.mxu0 0.0
    %1228 = vmatprep.subr.mxu0 0.0
    %1229 = vmatpush1.msra.mxu0 %v58
    %1230 = vmatprep.subr.mxu0 0.0
    %1231 = vmatpush1.msra.mxu0 %v57
    %1232 = vmatprep.subr.mxu0 0.0
    %1233 = vmatpush1.msra.mxu0 %v56
    %1234 = vmatprep.subr.mxu0 0.0
    %1235 = vmatpush1.msra.mxu0 %v55
    %1236 = vmatprep.subr.mxu0 0.0
    %1237 = vmatpush2.msra.mxu0 0.0
    %1238 = vmatprep.subr.mxu0 0.0
    %1239 = vmatpush2.msra.mxu0 0.0
    %1240 = vmatprep.subr.mxu0 0.0
    %1241 = vmatpush2.msra.mxu0 0.0
    %1242 = vmatprep.subr.mxu0 0.0
    %1243 = vmatpush2.msra.mxu0 0.0
    %1244 = vmatprep.subr.mxu0 0.0
    %1245 = vmatpush2.msra.mxu0 0.0
    %1246 = vmatprep.subr.mxu0 0.0
    %1247 = vmatpush2.msra.mxu0 0.0
    %1248 = vmatprep.subr.mxu0 0.0
    %1249 = vmatpush2.msra.mxu0 0.0
    %1250 = vmatprep.subr.mxu0 0.0
    %1251 = vmatpush2.msra.mxu0 0.0
    %1252 = vmatprep.subr.mxu0 0.0
    %1253 = vmatpush2.msra.mxu0 0.0
    %1254 = vmatprep.subr.mxu0 0.0
    %1255 = vmatpush2.msra.mxu0 0.0
    %1256 = vmatprep.subr.mxu0 0.0
    %1257 = vmatpush2.msra.mxu0 0.0
    %1258 = vmatprep.subr.mxu0 0.0
    %1259 = vmatpush2.msra.mxu0 0.0
    %1260 = vmatprep.subr.mxu0 0.0
    %1261 = vmatpush2.msra.mxu0 0.0
    %1262 = vmatprep.subr.mxu0 0.0
    %1263 = vmatpush2.msra.mxu0 0.0
    %1264 = vmatprep.subr.mxu0 0.0
    %1265 = vmatpush2.msra.mxu0 0.0
    %1266 = vmatprep.subr.mxu0 0.0
    %1267 = vmatpush2.msra.mxu0 0.0
    %1268 = vmatprep.mubr.f32.mxu0 0.0
    %1269 = vmatmul.mubr.f32.gmra.mxu0 %v1202
    %v1270 = vpop.f32.mrf.mxu0
    %v1271 = vadd.f32 0.0, %v1270
    %v1272 = vpop.f32.mrf.mxu0
    %1273 = vdwg.mxu0
    %v1275 = vrot.slane %v1271, 1
    %v1278 = vadd.f32 %v1199, %v1271
    %v1279 = vadd.f32 %v1200, %v1275
    %v1280 = vxor.u32 %v1278, 2147483648
    %v1281 = vxor.u32 %v1279, 2147483648
    %v1282 = vmul.f32 %v1280, 1.442695
    %v1283 = vpow.pop %v1282
    %v1284 = vmul.f32 %v1281, 1.442695
    %v1285 = vpow.pop %v1284
    %v1286 = vadd.f32 %v1283, 1.0
    %v1287 = vadd.f32 %v1285, 1.0
    %v1288 = vrcp.pop %v1286
    %v1289 = vmul.f32 1.0, %v1288
    %v1290 = vrcp.pop %v1287
    %v1291 = vmul.f32 1.0, %v1290
    %v1292 = vtanh.pop %v1278
    %v1293 = vtanh.pop %v1279
    %v1295 = vrot.slane %v1169, 1
    %1296 = vrot.lane.b32.xlu0 %v1169, 32
    %v1297 = vpop.permute.xlu0 %1296
    %1298 = vrot.lane.b32.xlu0 %v1295, 32
    %v1299 = vpop.permute.xlu0 %1298
    %v1302 = vmul.f32 %v1289, %v1297
    %v1303 = vmul.f32 %v1291, %v1299
    %1306 = vrot.lane.b32.xlu0 %v1292, 64
    %v1307 = vpop.permute.xlu0 %1306
    %1308 = vrot.lane.b32.xlu0 %v1293, 64
    %v1309 = vpop.permute.xlu0 %1308
    %v1312 = vmul.f32 %v1289, %v1307
    %v1313 = vmul.f32 %v1291, %v1309
    %1316 = vrot.lane.b32.xlu0 %v1312, 32
    %v1317 = vpop.permute.xlu0 %1316
    %1318 = vrot.lane.b32.xlu0 %v1313, 32
    %v1319 = vpop.permute.xlu0 %1318
    %v1322 = vadd.f32 %v1302, %v1317
    %v1323 = vadd.f32 %v1303, %v1319
    %v1324 = vtanh.pop %v1322
    %v1325 = vtanh.pop %v1323
    %1328 = vrot.lane.b32.xlu0 %v1324, 64
    %v1329 = vpop.permute.xlu0 %1328
    %1330 = vrot.lane.b32.xlu0 %v1325, 64
    %v1331 = vpop.permute.xlu0 %1330
    %v1334 = vmul.f32 %v1289, %v1329
    %v1335 = vmul.f32 %v1291, %v1331
    %v1336 = vstv %s1198
    %vm1337 = vcmp.lt.s32.totalorder %v1336, %v54
    %v1338 = vsel %vm1337, 1, 0
    %1339 = vset.pattern.permute.xlu0 0
    %1340 = vperm.xlu0 %1339, %v1338
    %v1341 = vpop.permute.xlu0 %1340
    %vm1342 = vcmp.eq.s32.totalorder %v1341, 1
    %v1345 = vrot.slane %v1335, 7
    %v1346 = vsel %vm210, %v1345, %v1334
    %1347 = vrot.lane.b32.xlu0 %v1346, 32
    %v1348 = vpop.permute.xlu0 %1347
    %v1350 = vsel %vm1342, %v1348, %v1161
    %v1353 = vrot.slane %v1323, 7
    %v1354 = vsel %vm210, %v1353, %v1322
    %1355 = vrot.lane.b32.xlu0 %v1354, 96
    %v1356 = vpop.permute.xlu0 %1355
    %v1358 = vsel %vm1342, %v1356, %v1169
    %v1359 = vsel %vm1342, %v1348, 0.0
    %v1362 = vunpack.c.l.s4 1966171168
    %v1363 = vunpack.c.0.s8 %v1362
    %v1364 = vlaneseq
    %v1365 = vshrl.u32 %v1364, 7
    %v1366 = vsub.s32 %v1363, %v1365
    %v1367 = vrot.slane %v1359, %v1366
    %v1368 = vcombine.high %v1367, %v1367
    %v1370 = vunpack.c.l.s4 1966171168
    %v1371 = vunpack.c.0.s8 %v1370
    %v1372 = vlaneseq
    %v1373 = vshrl.u32 %v1372, 7
    %v1374 = vsub.s32 %v1371, %v1373
    %v1375 = vrot.slane %v1367, %v1374
    %v1377 = vunpack.c.l.s4 1966171168
    %v1378 = vunpack.c.0.s8 %v1377
    %v1379 = vlaneseq
    %v1380 = vshrl.u32 %v1379, 7
    %v1381 = vsub.s32 %v1378, %v1380
    %v1382 = vrot.slane %v1368, %v1381
    %1385 = vst.msk [vmem:[#allocation9 + $0x6] sm:$0x1] %vm250, %v1375
    %1386 = vst.msk [vmem:[#allocation9 + $0xe] sm:$0x1] %vm250, %v1382
    %s1387 = sadd.s32 %s61, 7
    %v1388 = vld [vmem:[#allocation4 + $0x7] sm:$0x1]
    %v1389 = vld [vmem:[#allocation4 + $0xf] sm:$0x1]
    %v1391 = vsel %vm64, %v1350, 0
    %1393 = vmatprep.subr.mxu0 0.0
    %1394 = vmatpush1.msra.mxu0 0.0
    %1395 = vmatprep.subr.mxu0 0.0
    %1396 = vmatpush1.msra.mxu0 0.0
    %1397 = vmatprep.subr.mxu0 0.0
    %1398 = vmatpush1.msra.mxu0 0.0
    %1399 = vmatprep.subr.mxu0 0.0
    %1400 = vmatpush1.msra.mxu0 0.0
    %1401 = vmatprep.subr.mxu0 0.0
    %1402 = vmatpush1.msra.mxu0 0.0
    %1403 = vmatprep.subr.mxu0 0.0
    %1404 = vmatpush1.msra.mxu0 0.0
    %1405 = vmatprep.subr.mxu0 0.0
    %1406 = vmatpush1.msra.mxu0 0.0
    %1407 = vmatprep.subr.mxu0 0.0
    %1408 = vmatpush1.msra.mxu0 0.0
    %1409 = vmatprep.subr.mxu0 0.0
    %1410 = vmatpush1.msra.mxu0 0.0
    %1411 = vmatprep.subr.mxu0 0.0
    %1412 = vmatpush1.msra.mxu0 0.0
    %1413 = vmatprep.subr.mxu0 0.0
    %1414 = vmatpush1.msra.mxu0 0.0
    %1415 = vmatprep.subr.mxu0 0.0
    %1416 = vmatpush1.msra.mxu0 0.0
    %1417 = vmatprep.subr.mxu0 0.0
    %1418 = vmatpush1.msra.mxu0 %v58
    %1419 = vmatprep.subr.mxu0 0.0
    %1420 = vmatpush1.msra.mxu0 %v57
    %1421 = vmatprep.subr.mxu0 0.0
    %1422 = vmatpush1.msra.mxu0 %v56
    %1423 = vmatprep.subr.mxu0 0.0
    %1424 = vmatpush1.msra.mxu0 %v55
    %1425 = vmatprep.subr.mxu0 0.0
    %1426 = vmatpush2.msra.mxu0 0.0
    %1427 = vmatprep.subr.mxu0 0.0
    %1428 = vmatpush2.msra.mxu0 0.0
    %1429 = vmatprep.subr.mxu0 0.0
    %1430 = vmatpush2.msra.mxu0 0.0
    %1431 = vmatprep.subr.mxu0 0.0
    %1432 = vmatpush2.msra.mxu0 0.0
    %1433 = vmatprep.subr.mxu0 0.0
    %1434 = vmatpush2.msra.mxu0 0.0
    %1435 = vmatprep.subr.mxu0 0.0
    %1436 = vmatpush2.msra.mxu0 0.0
    %1437 = vmatprep.subr.mxu0 0.0
    %1438 = vmatpush2.msra.mxu0 0.0
    %1439 = vmatprep.subr.mxu0 0.0
    %1440 = vmatpush2.msra.mxu0 0.0
    %1441 = vmatprep.subr.mxu0 0.0
    %1442 = vmatpush2.msra.mxu0 0.0
    %1443 = vmatprep.subr.mxu0 0.0
    %1444 = vmatpush2.msra.mxu0 0.0
    %1445 = vmatprep.subr.mxu0 0.0
    %1446 = vmatpush2.msra.mxu0 0.0
    %1447 = vmatprep.subr.mxu0 0.0
    %1448 = vmatpush2.msra.mxu0 0.0
    %1449 = vmatprep.subr.mxu0 0.0
    %1450 = vmatpush2.msra.mxu0 0.0
    %1451 = vmatprep.subr.mxu0 0.0
    %1452 = vmatpush2.msra.mxu0 0.0
    %1453 = vmatprep.subr.mxu0 0.0
    %1454 = vmatpush2.msra.mxu0 0.0
    %1455 = vmatprep.subr.mxu0 0.0
    %1456 = vmatpush2.msra.mxu0 0.0
    %1457 = vmatprep.mubr.f32.mxu0 0.0
    %1458 = vmatmul.mubr.f32.gmra.mxu0 %v1391
    %v1459 = vpop.f32.mrf.mxu0
    %v1460 = vadd.f32 0.0, %v1459
    %v1461 = vpop.f32.mrf.mxu0
    %1462 = vdwg.mxu0
    %v1464 = vrot.slane %v1460, 1
    %v1467 = vadd.f32 %v1388, %v1460
    %v1468 = vadd.f32 %v1389, %v1464
    %v1469 = vxor.u32 %v1467, 2147483648
    %v1470 = vxor.u32 %v1468, 2147483648
    %v1471 = vmul.f32 %v1469, 1.442695
    %v1472 = vpow.pop %v1471
    %v1473 = vmul.f32 %v1470, 1.442695
    %v1474 = vpow.pop %v1473
    %v1475 = vadd.f32 %v1472, 1.0
    %v1476 = vadd.f32 %v1474, 1.0
    %v1477 = vrcp.pop %v1475
    %v1478 = vmul.f32 1.0, %v1477
    %v1479 = vrcp.pop %v1476
    %v1480 = vmul.f32 1.0, %v1479
    %v1481 = vtanh.pop %v1467
    %v1482 = vtanh.pop %v1468
    %v1484 = vrot.slane %v1358, 1
    %1485 = vrot.lane.b32.xlu0 %v1358, 32
    %v1486 = vpop.permute.xlu0 %1485
    %1487 = vrot.lane.b32.xlu0 %v1484, 32
    %v1488 = vpop.permute.xlu0 %1487
    %v1491 = vmul.f32 %v1478, %v1486
    %v1492 = vmul.f32 %v1480, %v1488
    %1495 = vrot.lane.b32.xlu0 %v1481, 64
    %v1496 = vpop.permute.xlu0 %1495
    %1497 = vrot.lane.b32.xlu0 %v1482, 64
    %v1498 = vpop.permute.xlu0 %1497
    %v1501 = vmul.f32 %v1478, %v1496
    %v1502 = vmul.f32 %v1480, %v1498
    %1505 = vrot.lane.b32.xlu0 %v1501, 32
    %v1506 = vpop.permute.xlu0 %1505
    %1507 = vrot.lane.b32.xlu0 %v1502, 32
    %v1508 = vpop.permute.xlu0 %1507
    %v1511 = vadd.f32 %v1491, %v1506
    %v1512 = vadd.f32 %v1492, %v1508
    %v1513 = vtanh.pop %v1511
    %v1514 = vtanh.pop %v1512
    %1517 = vrot.lane.b32.xlu0 %v1513, 64
    %v1518 = vpop.permute.xlu0 %1517
    %1519 = vrot.lane.b32.xlu0 %v1514, 64
    %v1520 = vpop.permute.xlu0 %1519
    %v1523 = vmul.f32 %v1478, %v1518
    %v1524 = vmul.f32 %v1480, %v1520
    %v1525 = vstv %s1387
    %vm1526 = vcmp.lt.s32.totalorder %v1525, %v54
    %v1527 = vsel %vm1526, 1, 0
    %1528 = vset.pattern.permute.xlu0 0
    %1529 = vperm.xlu0 %1528, %v1527
    %v1530 = vpop.permute.xlu0 %1529
    %vm1531 = vcmp.eq.s32.totalorder %v1530, 1
    %v1534 = vrot.slane %v1524, 7
    %v1535 = vsel %vm210, %v1534, %v1523
    %1536 = vrot.lane.b32.xlu0 %v1535, 32
    %v1537 = vpop.permute.xlu0 %1536
    %v1539 = vsel %vm1531, %v1537, %v1350
    %v1542 = vrot.slane %v1512, 7
    %v1543 = vsel %vm210, %v1542, %v1511
    %1544 = vrot.lane.b32.xlu0 %v1543, 96
    %v1545 = vpop.permute.xlu0 %1544
    %v1547 = vsel %vm1531, %v1545, %v1358
    %v1548 = vsel %vm1531, %v1537, 0.0
    %v1551 = vunpack.c.l.s4 1966171168
    %v1552 = vunpack.c.0.s8 %v1551
    %v1553 = vlaneseq
    %v1554 = vshrl.u32 %v1553, 7
    %v1555 = vsub.s32 %v1552, %v1554
    %v1556 = vrot.slane %v1548, %v1555
    %v1557 = vcombine.high %v1556, %v1556
    %v1559 = vunpack.c.l.s4 1966171168
    %v1560 = vunpack.c.0.s8 %v1559
    %v1561 = vlaneseq
    %v1562 = vshrl.u32 %v1561, 7
    %v1563 = vsub.s32 %v1560, %v1562
    %v1564 = vrot.slane %v1556, %v1563
    %v1566 = vunpack.c.l.s4 1966171168
    %v1567 = vunpack.c.0.s8 %v1566
    %v1568 = vlaneseq
    %v1569 = vshrl.u32 %v1568, 7
    %v1570 = vsub.s32 %v1567, %v1569
    %v1571 = vrot.slane %v1557, %v1570
    %1574 = vst.msk [vmem:[#allocation9 + $0x7] sm:$0x1] %vm250, %v1564
    %1575 = vst.msk [vmem:[#allocation9 + $0xf] sm:$0x1] %vm250, %v1571
    %vm1576 = vcmask 254976
    %1577 = vst.msk [vmem:[#allocation2] sm:$0x3] %vm1576, %v1539
    %1578 = vst.msk [vmem:[#allocation3] sm:$0x3] %vm1576, %v1547
    // Predicated region
    $region26: #{tpu_custom_call.1} parent=1 // pred_check
      %p1579 = pneg %p47
    $region27: #{tpu_custom_call.1} parent=1 // pred_check_branch
      %1581 = sbr.rel (%p1579) target = $region29
    $region28: #{tpu_custom_call.1} parent=1 // pred_region
      %1582 = vst.msk [vmem:[#allocation10] sm:$0x3] %vm1576, %v1539
      %1583 = vst.msk [vmem:[#allocation12] sm:$0x3] %vm1576, %v1547
    $region29: #{tpu_custom_call.1} parent=1 // pred_fallthru
      _
    // Predicated region
    $region30: #{tpu_custom_call.1} parent=1 // pred_check
      _
    $region31: #{tpu_custom_call.1} parent=1 // pred_check_branch
      %1585 = sbr.rel (0) target = $region33
    $region32: #{tpu_custom_call.1} parent=1 // pred_region
      %s1587 = ssub.s32 256, 256
      %1588 = vsyncadd [#allocation6], %s1587
      %s1589 = sshll.u32 [#allocation9], 4
      %s1590 = int_to_ptr.vmem [resolvable:$true] %s1589
      %1595 = dma.vmem_to_hbm [thread:$0]  %s1590, 256, %s3, [#allocation6], 128, 128, 8
    $region33: #{tpu_custom_call.1} parent=1 // pred_fallthru
      _
    // Predicated region
    $region34: #{tpu_custom_call.1} parent=1 // pred_check
      _
    $region35: #{tpu_custom_call.1} parent=1 // pred_check_branch
      %1597 = sbr.rel (0) target = $region37
    $region36: #{tpu_custom_call.1} parent=1 // pred_region
      %s1599 = ssub.s32 32, 32
      %1600 = vsyncadd [#allocation11], %s1599
      %s1602 = sshll.u32 [#allocation10], 4
      %s1603 = int_to_ptr.vmem [resolvable:$true] %s1602
      %1605 = dma.vmem_to_hbm [thread:$0]  %s1603, 32, %s4, [#allocation11]
    $region37: #{tpu_custom_call.1} parent=1 // pred_fallthru
      _
    // Predicated region
    $region38: #{tpu_custom_call.1} parent=1 // pred_check
      _
    $region39: #{tpu_custom_call.1} parent=1 // pred_check_branch
      %1607 = sbr.rel (0) target = $region41
    $region40: #{tpu_custom_call.1} parent=1 // pred_region
      %s1609 = ssub.s32 32, 32
      %1610 = vsyncadd [#allocation11], %s1609
      %s1612 = sshll.u32 [#allocation12], 4
      %s1613 = int_to_ptr.vmem [resolvable:$true] %s1612
      %1615 = dma.vmem_to_hbm [thread:$0]  %s1613, 32, %s5, [#allocation11]
    $region41: #{tpu_custom_call.1} parent=1 // pred_fallthru
      _
    // Predicated region
    $region42: #{tpu_custom_call.1} parent=1 // pred_check
      _
    $region43: #{tpu_custom_call.1} parent=1 // pred_check_branch
      %1617 = sbr.rel (0) target = $region45
    $region44: #{tpu_custom_call.1} parent=1 // pred_region
      %1618 = dma.done [#allocation6], 256
    $region45: #{tpu_custom_call.1} parent=1 // pred_fallthru
      _
    // Predicated region
    $region46: #{tpu_custom_call.1} parent=1 // pred_check
      _
    $region47: #{tpu_custom_call.1} parent=1 // pred_check_branch
      %1620 = sbr.rel (0) target = $region49
    $region48: #{tpu_custom_call.1} parent=1 // pred_region
      %1621 = dma.done [#allocation11], 32
    $region49: #{tpu_custom_call.1} parent=1 // pred_fallthru
      _
    // Predicated region
    $region50: #{tpu_custom_call.1} parent=1 // pred_check
      _
    $region51: #{tpu_custom_call.1} parent=1 // pred_check_branch
      %1623 = sbr.rel (0) target = $region53
    $region52: #{tpu_custom_call.1} parent=1 // pred_region
      %1624 = dma.done [#allocation11], 32
    $region53: #{tpu_custom_call.1} parent=1 // pred_fallthru
      _
    %1625 = vsyncpa [#allocation5], 1
    %1626 = vsyncpa [#allocation8], 1
    %1627 = vsyncpa [#allocation6], 1
    %1628 = vsyncpa [#allocation11], 1

</llo_original>
